<compile_context>
chip_gen: v6e
topology: v6e:2x2x1
jax: 0.10.0
libtpu: 0.0.40
codegen_flags: <defaults>
</compile_context>

<pallas_src>
import numpy as np
import jax
import jax.numpy as jnp
from jax.experimental import pallas as pl
from jax.experimental.pallas import tpu as pltpu

EPS = 1e-5


def bottleneck1_forward(x_nchw, params, *, stride=2, dilation=1, multi_grid=1):
    N, Cin, H, W = x_nchw.shape
    D = dilation * multi_grid              # conv2 padding == effective dilation
    s = stride
    P = params["W1"].shape[0]              # planes
    # residual add requires planes == 2*inplanes and stride == 2
    assert P == 2 * Cin and s == 2
    # TODO(synk): odd H/W would need masked halo writes in the parity split.
    assert H % 2 == 0 and W % 2 == 0

    H2, W2 = H // 2, W // 2                # parity sub-image extents
    Ho, Wo = H2, W2                        # conv2 / downsample output extents
    Hp2, Wp2 = H2 + D, W2 + D              # parity planes of D-padded stage-1 output

    # ---------- glue: fold BN into weights, fuse conv3 + downsample ----------
    def fold(g, be, m, v):
        sc = g / jnp.sqrt(v + EPS)
        return sc, be - m * sc

    s1, b1 = fold(params["g1"], params["be1"], params["m1"], params["v1"])
    s2, b2 = fold(params["g2"], params["be2"], params["m2"], params["v2"])
    s3, b3 = fold(params["g3"], params["be3"], params["m3"], params["v3"])
    sd, bd = fold(params["gd"], params["bed"], params["md"], params["vd"])

    w1s = (params["W1"][:, :, 0, 0].T * s1[None, :]).astype(jnp.bfloat16)       # (Cin, P)
    w2s = (jnp.transpose(params["W2"], (2, 3, 1, 0))
           * s2[None, None, None, :]).astype(jnp.bfloat16)                      # (3,3,P,P)
    w3s = params["W3"][:, :, 0, 0].T * s3[None, :]                              # (P, P)
    wds = params["Wd"][:, :, 0, 0].T * sd[None, :]                              # (Cin, P)
    wcat = jnp.concatenate([w3s, wds], axis=0).astype(jnp.bfloat16)             # (P+Cin, P)

    b1 = b1.reshape(1, P).astype(jnp.float32)
    b2 = b2.reshape(1, P).astype(jnp.float32)
    bcat = (b3 + bd).reshape(1, P).astype(jnp.float32)

    # ---- stride-2 space-to-depth of x: (N,H,W,C) -> (N, 4*H2*W2, C), bf16 ----
    # row order is (row-parity rp, col-parity cp, a, b) with h = 2a+rp, w = 2b+cp
    x = jnp.transpose(x_nchw, (0, 2, 3, 1))
    xs = (x.reshape(N, H2, 2, W2, 2, Cin)
            .transpose(0, 2, 4, 1, 3, 5)
            .reshape(N, 4 * H2 * W2, Cin)
            .astype(jnp.bfloat16))

    def kernel(x_ref, w1_ref, b1_ref, w2_ref, b2_ref, wcat_ref, bcat_ref,
               out_ref, plane_ref):
        pdt = plane_ref.dtype

        # ---- stage 1: conv1(1x1) + bn1 + relu as ONE (4*H2*W2, Cin) matmul ----
        t1 = jnp.dot(x_ref[0], w1_ref[...], preferred_element_type=jnp.float32)
        t1 = jnp.maximum(t1 + b1_ref[...], 0.0).astype(pdt)        # (4*H2*W2, P)

        # Scatter the four parity sub-images into the parity planes of the
        # D-padded stage-1 output.  Only the halo (never written below) is
        # zeroed, the interior is fully overwritten -> scratch is valid every
        # grid step even under "parallel" megacore splitting.
        # (4 / 9 iteration Python loops below stay unrolled on purpose: the
        #  slice offsets must be static for contiguous, non-strided accesses.)
        for rp in range(2):
            for cp in range(2):
                pr, pc = (rp + D) % 2, (cp + D) % 2
                ro, co = (rp + D) // 2, (cp + D) // 2
                if ro > 0:
                    plane_ref[pr, pc, 0:ro, :, :] = jnp.zeros((ro, Wp2, P), pdt)
                if ro + H2 < Hp2:
                    plane_ref[pr, pc, ro + H2:Hp2, :, :] = (
                        jnp.zeros((Hp2 - ro - H2, Wp2, P), pdt))
                if co > 0:
                    plane_ref[pr, pc, ro:ro + H2, 0:co, :] = (
                        jnp.zeros((H2, co, P), pdt))
                if co + W2 < Wp2:
                    plane_ref[pr, pc, ro:ro + H2, co + W2:Wp2, :] = (
                        jnp.zeros((H2, Wp2 - co - W2, P), pdt))
                base = (rp * 2 + cp) * H2 * W2
                plane_ref[pr, pc, ro:ro + H2, co:co + W2, :] = (
                    t1[base:base + H2 * W2, :].reshape(H2, W2, P))

        # ---- stage 2: conv2(3x3, stride 2, dilation D) + bn2 + relu --------
        # every tap is a contiguous (Ho, Wo, P) slice of one parity plane
        acc = jnp.zeros((Ho * Wo, P), jnp.float32)
        for ky in range(3):
            rpar, rblk = (ky * D) % 2, (ky * D) // 2
            for kx in range(3):
                cpar, cblk = (kx * D) % 2, (kx * D) // 2
                tap = plane_ref[rpar, cpar, rblk:rblk + Ho, cblk:cblk + Wo, :]
                acc = acc + jnp.dot(tap.reshape(Ho * Wo, P), w2_ref[ky, kx],
                                    preferred_element_type=jnp.float32)
        t2 = jnp.maximum(acc + b2_ref[...], 0.0).astype(jnp.bfloat16)

        # ---- stage 3: conv3(1x1)+bn3 fused with downsample(1x1, s=2)+bnd ----
        # x[::2, ::2] is exactly the (rp=0, cp=0) sub-image = first chunk of x_ref
        x00 = x_ref[0, 0:Ho * Wo, :]                               # (Ho*Wo, Cin)
        cat = jnp.concatenate([t2, x00], axis=-1)                  # (Ho*Wo, P+Cin)
        y = jnp.dot(cat, wcat_ref[...], preferred_element_type=jnp.float32)
        y = jnp.maximum(y + bcat_ref[...], 0.0)
        out_ref[0] = y.astype(out_ref.dtype)                       # one coalesced store

    def full_spec(shape):
        nd = len(shape)
        return pl.BlockSpec(shape, lambda n, _nd=nd: (0,) * _nd)

    out_flat = pl.pallas_call(
        kernel,
        out_shape=jax.ShapeDtypeStruct((N, Ho * Wo, P), jnp.float32),
        grid=(N,),
        in_specs=[
            pl.BlockSpec((1, 4 * H2 * W2, Cin), lambda n: (n, 0, 0)),   # x (parity-split)
            full_spec((Cin, P)), full_spec((1, P)),                     # conv1 (+bn1)
            full_spec((3, 3, P, P)), full_spec((1, P)),                 # conv2 (+bn2)
            full_spec((P + Cin, P)), full_spec((1, P)),                 # conv3 + downsample
        ],
        out_specs=pl.BlockSpec((1, Ho * Wo, P), lambda n: (n, 0, 0)),
        scratch_shapes=[pltpu.VMEM((2, 2, Hp2, Wp2, P), jnp.bfloat16)],
        compiler_params=pltpu.CompilerParams(dimension_semantics=("parallel",)),
    )(xs, w1s, b1, w2s, b2, wcat, bcat)

    out = out_flat.reshape(N, Ho, Wo, P)
    return jnp.transpose(out, (0, 3, 1, 2))        # back to NCHW


# ---------------- deterministic parameter init + pure-JAX reference ----------------

def init_params(key, inplanes, planes):
    ks = jax.random.split(key, 8)

    def conv_w(k, o, i, kh, kw):
        fan = i * kh * kw
        return jax.random.normal(k, (o, i, kh, kw), jnp.float32) / np.sqrt(fan)

    def bn(k, c):
        k1, k2, k3, k4 = jax.random.split(k, 4)
        gamma = jax.random.uniform(k1, (c,), jnp.float32, 0.5, 1.5)
        beta = jax.random.normal(k2, (c,), jnp.float32) * 0.1
        mean = jax.random.normal(k3, (c,), jnp.float32) * 0.1
        var = jax.random.uniform(k4, (c,), jnp.float32, 0.5, 1.5)
        return gamma, beta, mean, var

    p = {}
    p["W1"] = conv_w(ks[0], planes, inplanes, 1, 1)
    p["W2"] = conv_w(ks[1], planes, planes, 3, 3)
    p["W3"] = conv_w(ks[2], planes, planes, 1, 1)
    p["Wd"] = conv_w(ks[3], 2 * inplanes, inplanes, 1, 1)
    p["g1"], p["be1"], p["m1"], p["v1"] = bn(ks[4], planes)
    p["g2"], p["be2"], p["m2"], p["v2"] = bn(ks[5], planes)
    p["g3"], p["be3"], p["m3"], p["v3"] = bn(ks[6], planes)
    p["gd"], p["bed"], p["md"], p["vd"] = bn(ks[7], 2 * inplanes)
    return p


def reference_forward(x, p, *, stride=2, dilation=1, multi_grid=1):
    def conv(x, w, s, pad, dil):
        return jax.lax.conv_general_dilated(
            x, w, window_strides=(s, s), padding=[(pad, pad), (pad, pad)],
            rhs_dilation=(dil, dil),
            dimension_numbers=("NCHW", "OIHW", "NCHW"),
            precision=jax.lax.Precision.HIGHEST)

    def bn(y, g, b, m, v):
        sh = (1, -1, 1, 1)
        return ((y - m.reshape(sh)) / jnp.sqrt(v.reshape(sh) + EPS)
                * g.reshape(sh) + b.reshape(sh))

    D = dilation * multi_grid
    out = jax.nn.relu(bn(conv(x, p["W1"], 1, 0, 1), p["g1"], p["be1"], p["m1"], p["v1"]))
    out = jax.nn.relu(bn(conv(out, p["W2"], stride, D, D), p["g2"], p["be2"], p["m2"], p["v2"]))
    out = bn(conv(out, p["W3"], 1, 0, 1), p["g3"], p["be3"], p["m3"], p["v3"])
    res = bn(conv(x, p["Wd"], 2, 0, 1), p["gd"], p["bed"], p["md"], p["vd"])
    return jax.nn.relu(out + res)


if __name__ == "__main__":
    key = jax.random.PRNGKey(0)
    kx, kp = jax.random.split(key)
    N, Cin, H, W = 2, 4, 16, 16
    planes = 2 * Cin                      # required so out + downsample(x) is valid
    x = jax.random.normal(kx, (N, Cin, H, W), jnp.float32)
    params = init_params(kp, Cin, planes)

    out = jax.block_until_ready(bottleneck1_forward(x, params, stride=2, dilation=1))
    ref = jax.block_until_ready(reference_forward(x, params, stride=2, dilation=1))

    assert out.shape == (N, planes, H // 2, W // 2), out.shape
    # kernel computes in bf16 (f32 accumulation); tolerance set accordingly
    np.testing.assert_allclose(np.asarray(out), np.asarray(ref), rtol=3e-2, atol=3e-2)
    print("KERNEL_OK")
</pallas_src>

<mosaic_0001>
module attributes {stable_mosaic.version = 11 : i64} {
  func.func @kernel(%arg0: i32, %arg1: memref<1x256x4xbf16, #tpu.memory_space<vmem>>, %arg2: memref<4x8xbf16, #tpu.memory_space<vmem>>, %arg3: memref<1x8xf32, #tpu.memory_space<vmem>>, %arg4: memref<3x3x8x8xbf16, #tpu.memory_space<vmem>>, %arg5: memref<1x8xf32, #tpu.memory_space<vmem>>, %arg6: memref<12x8xbf16, #tpu.memory_space<vmem>>, %arg7: memref<1x8xf32, #tpu.memory_space<vmem>>, %arg8: memref<1x64x8xf32, #tpu.memory_space<vmem>>, %arg9: memref<2x2x9x9x8xbf16, #tpu.memory_space<vmem>>) attributes {dimension_semantics = [#tpu.dimension_semantics<parallel>], iteration_bounds = array<i64: 2>, scalar_prefetch = 0 : i64, scratch_operands = 1 : i64, tpu.core_type = #tpu.core_type<tc>, window_params = [{transform_indices = @transform_0, window_bounds = array<i64: 1, 256, 4>}, {pipeline_mode = #tpu.pipeline_mode<synchronous>, transform_indices = @transform_1, window_bounds = array<i64: 4, 8>}, {pipeline_mode = #tpu.pipeline_mode<synchronous>, transform_indices = @transform_2, window_bounds = array<i64: 1, 8>}, {pipeline_mode = #tpu.pipeline_mode<synchronous>, transform_indices = @transform_3, window_bounds = array<i64: 3, 3, 8, 8>}, {pipeline_mode = #tpu.pipeline_mode<synchronous>, transform_indices = @transform_4, window_bounds = array<i64: 1, 8>}, {pipeline_mode = #tpu.pipeline_mode<synchronous>, transform_indices = @transform_5, window_bounds = array<i64: 12, 8>}, {pipeline_mode = #tpu.pipeline_mode<synchronous>, transform_indices = @transform_6, window_bounds = array<i64: 1, 8>}, {transform_indices = @transform_7, window_bounds = array<i64: 1, 64, 8>}]} {
    %c0 = arith.constant 0 : index
    %c0_0 = arith.constant 0 : index
    %c0_1 = arith.constant 0 : index
    %0 = vector.load %arg1[%c0, %c0_0, %c0_1] : memref<1x256x4xbf16, #tpu.memory_space<vmem>>, vector<1x256x4xbf16>
    %1 = vector.shape_cast %0 : vector<1x256x4xbf16> to vector<256x4xbf16>
    %c0_2 = arith.constant 0 : index
    %c0_3 = arith.constant 0 : index
    %2 = vector.load %arg2[%c0_2, %c0_3] : memref<4x8xbf16, #tpu.memory_space<vmem>>, vector<4x8xbf16>
    %cst = arith.constant dense<0.000000e+00> : vector<256x8xf32>
    %3 = tpu.matmul %1, %2, %cst {dimension_numbers = #tpu.dot_dimension_numbers<[1], [0], [0], [1], [0, 0, 1, 1], [], []>} : vector<256x4xbf16>, vector<4x8xbf16>, vector<256x8xf32> -> vector<256x8xf32>
    %c0_4 = arith.constant 0 : index
    %c0_5 = arith.constant 0 : index
    %4 = vector.load %arg3[%c0_4, %c0_5] : memref<1x8xf32, #tpu.memory_space<vmem>>, vector<1x8xf32>
    %5 = vector.broadcast %4 : vector<1x8xf32> to vector<256x8xf32>
    %6 = arith.addf %3, %5 : vector<256x8xf32>
    %cst_6 = arith.constant 0.000000e+00 : f32
    %7 = vector.broadcast %cst_6 : f32 to vector<256x8xf32>
    %8 = arith.maximumf %6, %7 : vector<256x8xf32>
    %9 = arith.truncf %8 : vector<256x8xf32> to vector<256x8xbf16>
    %cst_7 = arith.constant 0.000000e+00 : bf16
    %10 = vector.broadcast %cst_7 : bf16 to vector<1x9x8xbf16>
    %c1 = arith.constant 1 : index
    %c1_8 = arith.constant 1 : index
    %c8 = arith.constant 8 : index
    %c0_9 = arith.constant 0 : index
    %c0_10 = arith.constant 0 : index
    %11 = vector.load %arg9[%c1, %c1_8, %c8, %c0_9, %c0_10] : memref<2x2x9x9x8xbf16, #tpu.memory_space<vmem>>, vector<1x1x1x9x8xbf16>
    %12 = vector.shape_cast %11 : vector<1x1x1x9x8xbf16> to vector<1x9x8xbf16>
    %13 = vector.shape_cast %10 : vector<1x9x8xbf16> to vector<1x1x1x9x8xbf16>
    tpu.vector_store %arg9[%c1, %c1_8, %c8, %c0_9, %c0_10], %13 {strides = array<i32>} : memref<2x2x9x9x8xbf16, #tpu.memory_space<vmem>>, vector<1x1x1x9x8xbf16>,
    %cst_11 = arith.constant 0.000000e+00 : bf16
    %14 = vector.broadcast %cst_11 : bf16 to vector<8x1x8xbf16>
    %c1_12 = arith.constant 1 : index
    %c1_13 = arith.constant 1 : index
    %c0_14 = arith.constant 0 : index
    %c8_15 = arith.constant 8 : index
    %c0_16 = arith.constant 0 : index
    %15 = vector.load %arg9[%c1_12, %c1_13, %c0_14, %c8_15, %c0_16] : memref<2x2x9x9x8xbf16, #tpu.memory_space<vmem>>, vector<1x1x8x1x8xbf16>
    %16 = vector.shape_cast %15 : vector<1x1x8x1x8xbf16> to vector<8x1x8xbf16>
    %17 = vector.shape_cast %14 : vector<8x1x8xbf16> to vector<1x1x8x1x8xbf16>
    tpu.vector_store %arg9[%c1_12, %c1_13, %c0_14, %c8_15, %c0_16], %17 {strides = array<i32>} : memref<2x2x9x9x8xbf16, #tpu.memory_space<vmem>>, vector<1x1x8x1x8xbf16>,
    %18 = vector.extract_strided_slice %9 {offsets = [0, 0], sizes = [64, 8], strides = [1, 1]} : vector<256x8xbf16> to vector<64x8xbf16>
    %19 = vector.shape_cast %18 : vector<64x8xbf16> to vector<8x8x8xbf16>
    %c1_17 = arith.constant 1 : index
    %c1_18 = arith.constant 1 : index
    %c0_19 = arith.constant 0 : index
    %c0_20 = arith.constant 0 : index
    %c0_21 = arith.constant 0 : index
    %20 = vector.load %arg9[%c1_17, %c1_18, %c0_19, %c0_20, %c0_21] : memref<2x2x9x9x8xbf16, #tpu.memory_space<vmem>>, vector<1x1x8x8x8xbf16>
    %21 = vector.shape_cast %20 : vector<1x1x8x8x8xbf16> to vector<8x8x8xbf16>
    %22 = vector.shape_cast %19 : vector<8x8x8xbf16> to vector<1x1x8x8x8xbf16>
    tpu.vector_store %arg9[%c1_17, %c1_18, %c0_19, %c0_20, %c0_21], %22 {strides = array<i32>} : memref<2x2x9x9x8xbf16, #tpu.memory_space<vmem>>, vector<1x1x8x8x8xbf16>,
    %cst_22 = arith.constant 0.000000e+00 : bf16
    %23 = vector.broadcast %cst_22 : bf16 to vector<1x9x8xbf16>
    %c1_23 = arith.constant 1 : index
    %c0_24 = arith.constant 0 : index
    %c8_25 = arith.constant 8 : index
    %c0_26 = arith.constant 0 : index
    %c0_27 = arith.constant 0 : index
    %24 = vector.load %arg9[%c1_23, %c0_24, %c8_25, %c0_26, %c0_27] : memref<2x2x9x9x8xbf16, #tpu.memory_space<vmem>>, vector<1x1x1x9x8xbf16>
    %25 = vector.shape_cast %24 : vector<1x1x1x9x8xbf16> to vector<1x9x8xbf16>
    %26 = vector.shape_cast %23 : vector<1x9x8xbf16> to vector<1x1x1x9x8xbf16>
    tpu.vector_store %arg9[%c1_23, %c0_24, %c8_25, %c0_26, %c0_27], %26 {strides = array<i32>} : memref<2x2x9x9x8xbf16, #tpu.memory_space<vmem>>, vector<1x1x1x9x8xbf16>,
    %cst_28 = arith.constant 0.000000e+00 : bf16
    %27 = vector.broadcast %cst_28 : bf16 to vector<8x1x8xbf16>
    %c1_29 = arith.constant 1 : index
    %c0_30 = arith.constant 0 : index
    %c0_31 = arith.constant 0 : index
    %c0_32 = arith.constant 0 : index
    %c0_33 = arith.constant 0 : index
    %28 = vector.load %arg9[%c1_29, %c0_30, %c0_31, %c0_32, %c0_33] : memref<2x2x9x9x8xbf16, #tpu.memory_space<vmem>>, vector<1x1x8x1x8xbf16>
    %29 = vector.shape_cast %28 : vector<1x1x8x1x8xbf16> to vector<8x1x8xbf16>
    %30 = vector.shape_cast %27 : vector<8x1x8xbf16> to vector<1x1x8x1x8xbf16>
    tpu.vector_store %arg9[%c1_29, %c0_30, %c0_31, %c0_32, %c0_33], %30 {strides = array<i32>} : memref<2x2x9x9x8xbf16, #tpu.memory_space<vmem>>, vector<1x1x8x1x8xbf16>,
    %31 = vector.extract_strided_slice %9 {offsets = [64, 0], sizes = [64, 8], strides = [1, 1]} : vector<256x8xbf16> to vector<64x8xbf16>
    %32 = vector.shape_cast %31 : vector<64x8xbf16> to vector<8x8x8xbf16>
    %c1_34 = arith.constant 1 : index
    %c0_35 = arith.constant 0 : index
    %c0_36 = arith.constant 0 : index
    %c1_37 = arith.constant 1 : index
    %c0_38 = arith.constant 0 : index
    %33 = vector.load %arg9[%c1_34, %c0_35, %c0_36, %c1_37, %c0_38] : memref<2x2x9x9x8xbf16, #tpu.memory_space<vmem>>, vector<1x1x8x8x8xbf16>
    %34 = vector.shape_cast %33 : vector<1x1x8x8x8xbf16> to vector<8x8x8xbf16>
    %35 = vector.shape_cast %32 : vector<8x8x8xbf16> to vector<1x1x8x8x8xbf16>
    tpu.vector_store %arg9[%c1_34, %c0_35, %c0_36, %c1_37, %c0_38], %35 {strides = array<i32>} : memref<2x2x9x9x8xbf16, #tpu.memory_space<vmem>>, vector<1x1x8x8x8xbf16>,
    %cst_39 = arith.constant 0.000000e+00 : bf16
    %36 = vector.broadcast %cst_39 : bf16 to vector<1x9x8xbf16>
    %c0_40 = arith.constant 0 : index
    %c1_41 = arith.constant 1 : index
    %c0_42 = arith.constant 0 : index
    %c0_43 = arith.constant 0 : index
    %c0_44 = arith.constant 0 : index
    %37 = vector.load %arg9[%c0_40, %c1_41, %c0_42, %c0_43, %c0_44] : memref<2x2x9x9x8xbf16, #tpu.memory_space<vmem>>, vector<1x1x1x9x8xbf16>
    %38 = vector.shape_cast %37 : vector<1x1x1x9x8xbf16> to vector<1x9x8xbf16>
    %39 = vector.shape_cast %36 : vector<1x9x8xbf16> to vector<1x1x1x9x8xbf16>
    tpu.vector_store %arg9[%c0_40, %c1_41, %c0_42, %c0_43, %c0_44], %39 {strides = array<i32>} : memref<2x2x9x9x8xbf16, #tpu.memory_space<vmem>>, vector<1x1x1x9x8xbf16>,
    %cst_45 = arith.constant 0.000000e+00 : bf16
    %40 = vector.broadcast %cst_45 : bf16 to vector<8x1x8xbf16>
    %c0_46 = arith.constant 0 : index
    %c1_47 = arith.constant 1 : index
    %c1_48 = arith.constant 1 : index
    %c8_49 = arith.constant 8 : index
    %c0_50 = arith.constant 0 : index
    %41 = vector.load %arg9[%c0_46, %c1_47, %c1_48, %c8_49, %c0_50] : memref<2x2x9x9x8xbf16, #tpu.memory_space<vmem>>, vector<1x1x8x1x8xbf16>
    %42 = vector.shape_cast %41 : vector<1x1x8x1x8xbf16> to vector<8x1x8xbf16>
    %43 = vector.shape_cast %40 : vector<8x1x8xbf16> to vector<1x1x8x1x8xbf16>
    tpu.vector_store %arg9[%c0_46, %c1_47, %c1_48, %c8_49, %c0_50], %43 {strides = array<i32>} : memref<2x2x9x9x8xbf16, #tpu.memory_space<vmem>>, vector<1x1x8x1x8xbf16>,
    %44 = vector.extract_strided_slice %9 {offsets = [128, 0], sizes = [64, 8], strides = [1, 1]} : vector<256x8xbf16> to vector<64x8xbf16>
    %45 = vector.shape_cast %44 : vector<64x8xbf16> to vector<8x8x8xbf16>
    %c0_51 = arith.constant 0 : index
    %c1_52 = arith.constant 1 : index
    %c1_53 = arith.constant 1 : index
    %c0_54 = arith.constant 0 : index
    %c0_55 = arith.constant 0 : index
    %46 = vector.load %arg9[%c0_51, %c1_52, %c1_53, %c0_54, %c0_55] : memref<2x2x9x9x8xbf16, #tpu.memory_space<vmem>>, vector<1x1x8x8x8xbf16>
    %47 = vector.shape_cast %46 : vector<1x1x8x8x8xbf16> to vector<8x8x8xbf16>
    %48 = vector.shape_cast %45 : vector<8x8x8xbf16> to vector<1x1x8x8x8xbf16>
    tpu.vector_store %arg9[%c0_51, %c1_52, %c1_53, %c0_54, %c0_55], %48 {strides = array<i32>} : memref<2x2x9x9x8xbf16, #tpu.memory_space<vmem>>, vector<1x1x8x8x8xbf16>,
    %cst_56 = arith.constant 0.000000e+00 : bf16
    %49 = vector.broadcast %cst_56 : bf16 to vector<1x9x8xbf16>
    %c0_57 = arith.constant 0 : index
    %c0_58 = arith.constant 0 : index
    %c0_59 = arith.constant 0 : index
    %c0_60 = arith.constant 0 : index
    %c0_61 = arith.constant 0 : index
    %50 = vector.load %arg9[%c0_57, %c0_58, %c0_59, %c0_60, %c0_61] : memref<2x2x9x9x8xbf16, #tpu.memory_space<vmem>>, vector<1x1x1x9x8xbf16>
    %51 = vector.shape_cast %50 : vector<1x1x1x9x8xbf16> to vector<1x9x8xbf16>
    %52 = vector.shape_cast %49 : vector<1x9x8xbf16> to vector<1x1x1x9x8xbf16>
    tpu.vector_store %arg9[%c0_57, %c0_58, %c0_59, %c0_60, %c0_61], %52 {strides = array<i32>} : memref<2x2x9x9x8xbf16, #tpu.memory_space<vmem>>, vector<1x1x1x9x8xbf16>,
    %cst_62 = arith.constant 0.000000e+00 : bf16
    %53 = vector.broadcast %cst_62 : bf16 to vector<8x1x8xbf16>
    %c0_63 = arith.constant 0 : index
    %c0_64 = arith.constant 0 : index
    %c1_65 = arith.constant 1 : index
    %c0_66 = arith.constant 0 : index
    %c0_67 = arith.constant 0 : index
    %54 = vector.load %arg9[%c0_63, %c0_64, %c1_65, %c0_66, %c0_67] : memref<2x2x9x9x8xbf16, #tpu.memory_space<vmem>>, vector<1x1x8x1x8xbf16>
    %55 = vector.shape_cast %54 : vector<1x1x8x1x8xbf16> to vector<8x1x8xbf16>
    %56 = vector.shape_cast %53 : vector<8x1x8xbf16> to vector<1x1x8x1x8xbf16>
    tpu.vector_store %arg9[%c0_63, %c0_64, %c1_65, %c0_66, %c0_67], %56 {strides = array<i32>} : memref<2x2x9x9x8xbf16, #tpu.memory_space<vmem>>, vector<1x1x8x1x8xbf16>,
    %57 = vector.extract_strided_slice %9 {offsets = [192, 0], sizes = [64, 8], strides = [1, 1]} : vector<256x8xbf16> to vector<64x8xbf16>
    %58 = vector.shape_cast %57 : vector<64x8xbf16> to vector<8x8x8xbf16>
    %c0_68 = arith.constant 0 : index
    %c0_69 = arith.constant 0 : index
    %c1_70 = arith.constant 1 : index
    %c1_71 = arith.constant 1 : index
    %c0_72 = arith.constant 0 : index
    %59 = vector.load %arg9[%c0_68, %c0_69, %c1_70, %c1_71, %c0_72] : memref<2x2x9x9x8xbf16, #tpu.memory_space<vmem>>, vector<1x1x8x8x8xbf16>
    %60 = vector.shape_cast %59 : vector<1x1x8x8x8xbf16> to vector<8x8x8xbf16>
    %61 = vector.shape_cast %58 : vector<8x8x8xbf16> to vector<1x1x8x8x8xbf16>
    tpu.vector_store %arg9[%c0_68, %c0_69, %c1_70, %c1_71, %c0_72], %61 {strides = array<i32>} : memref<2x2x9x9x8xbf16, #tpu.memory_space<vmem>>, vector<1x1x8x8x8xbf16>,
    %cst_73 = arith.constant 0.000000e+00 : f32
    %62 = vector.broadcast %cst_73 : f32 to vector<64x8xf32>
    %c0_74 = arith.constant 0 : index
    %c0_75 = arith.constant 0 : index
    %c0_76 = arith.constant 0 : index
    %c0_77 = arith.constant 0 : index
    %c0_78 = arith.constant 0 : index
    %63 = vector.load %arg9[%c0_74, %c0_75, %c0_76, %c0_77, %c0_78] : memref<2x2x9x9x8xbf16, #tpu.memory_space<vmem>>, vector<1x1x8x8x8xbf16>
    %64 = vector.shape_cast %63 : vector<1x1x8x8x8xbf16> to vector<8x8x8xbf16>
    %65 = vector.shape_cast %64 : vector<8x8x8xbf16> to vector<64x8xbf16>
    %c0_79 = arith.constant 0 : index
    %c0_80 = arith.constant 0 : index
    %c0_81 = arith.constant 0 : index
    %c0_82 = arith.constant 0 : index
    %66 = vector.load %arg4[%c0_79, %c0_80, %c0_81, %c0_82] : memref<3x3x8x8xbf16, #tpu.memory_space<vmem>>, vector<1x1x8x8xbf16>
    %67 = vector.shape_cast %66 : vector<1x1x8x8xbf16> to vector<8x8xbf16>
    %cst_83 = arith.constant dense<0.000000e+00> : vector<64x8xf32>
    %68 = tpu.matmul %65, %67, %cst_83 {dimension_numbers = #tpu.dot_dimension_numbers<[1], [0], [0], [1], [0, 0, 1, 1], [], []>} : vector<64x8xbf16>, vector<8x8xbf16>, vector<64x8xf32> -> vector<64x8xf32>
    %69 = arith.addf %62, %68 : vector<64x8xf32>
    %c0_84 = arith.constant 0 : index
    %c1_85 = arith.constant 1 : index
    %c0_86 = arith.constant 0 : index
    %c0_87 = arith.constant 0 : index
    %c0_88 = arith.constant 0 : index
    %70 = vector.load %arg9[%c0_84, %c1_85, %c0_86, %c0_87, %c0_88] : memref<2x2x9x9x8xbf16, #tpu.memory_space<vmem>>, vector<1x1x8x8x8xbf16>
    %71 = vector.shape_cast %70 : vector<1x1x8x8x8xbf16> to vector<8x8x8xbf16>
    %72 = vector.shape_cast %71 : vector<8x8x8xbf16> to vector<64x8xbf16>
    %c0_89 = arith.constant 0 : index
    %c1_90 = arith.constant 1 : index
    %c0_91 = arith.constant 0 : index
    %c0_92 = arith.constant 0 : index
    %73 = vector.load %arg4[%c0_89, %c1_90, %c0_91, %c0_92] : memref<3x3x8x8xbf16, #tpu.memory_space<vmem>>, vector<1x1x8x8xbf16>
    %74 = vector.shape_cast %73 : vector<1x1x8x8xbf16> to vector<8x8xbf16>
    %cst_93 = arith.constant dense<0.000000e+00> : vector<64x8xf32>
    %75 = tpu.matmul %72, %74, %cst_93 {dimension_numbers = #tpu.dot_dimension_numbers<[1], [0], [0], [1], [0, 0, 1, 1], [], []>} : vector<64x8xbf16>, vector<8x8xbf16>, vector<64x8xf32> -> vector<64x8xf32>
    %76 = arith.addf %69, %75 : vector<64x8xf32>
    %c0_94 = arith.constant 0 : index
    %c0_95 = arith.constant 0 : index
    %c0_96 = arith.constant 0 : index
    %c1_97 = arith.constant 1 : index
    %c0_98 = arith.constant 0 : index
    %77 = vector.load %arg9[%c0_94, %c0_95, %c0_96, %c1_97, %c0_98] : memref<2x2x9x9x8xbf16, #tpu.memory_space<vmem>>, vector<1x1x8x8x8xbf16>
    %78 = vector.shape_cast %77 : vector<1x1x8x8x8xbf16> to vector<8x8x8xbf16>
    %79 = vector.shape_cast %78 : vector<8x8x8xbf16> to vector<64x8xbf16>
    %c0_99 = arith.constant 0 : index
    %c2 = arith.constant 2 : index
    %c0_100 = arith.constant 0 : index
    %c0_101 = arith.constant 0 : index
    %80 = vector.load %arg4[%c0_99, %c2, %c0_100, %c0_101] : memref<3x3x8x8xbf16, #tpu.memory_space<vmem>>, vector<1x1x8x8xbf16>
    %81 = vector.shape_cast %80 : vector<1x1x8x8xbf16> to vector<8x8xbf16>
    %cst_102 = arith.constant dense<0.000000e+00> : vector<64x8xf32>
    %82 = tpu.matmul %79, %81, %cst_102 {dimension_numbers = #tpu.dot_dimension_numbers<[1], [0], [0], [1], [0, 0, 1, 1], [], []>} : vector<64x8xbf16>, vector<8x8xbf16>, vector<64x8xf32> -> vector<64x8xf32>
    %83 = arith.addf %76, %82 : vector<64x8xf32>
    %c1_103 = arith.constant 1 : index
    %c0_104 = arith.constant 0 : index
    %c0_105 = arith.constant 0 : index
    %c0_106 = arith.constant 0 : index
    %c0_107 = arith.constant 0 : index
    %84 = vector.load %arg9[%c1_103, %c0_104, %c0_105, %c0_106, %c0_107] : memref<2x2x9x9x8xbf16, #tpu.memory_space<vmem>>, vector<1x1x8x8x8xbf16>
    %85 = vector.shape_cast %84 : vector<1x1x8x8x8xbf16> to vector<8x8x8xbf16>
    %86 = vector.shape_cast %85 : vector<8x8x8xbf16> to vector<64x8xbf16>
    %c1_108 = arith.constant 1 : index
    %c0_109 = arith.constant 0 : index
    %c0_110 = arith.constant 0 : index
    %c0_111 = arith.constant 0 : index
    %87 = vector.load %arg4[%c1_108, %c0_109, %c0_110, %c0_111] : memref<3x3x8x8xbf16, #tpu.memory_space<vmem>>, vector<1x1x8x8xbf16>
    %88 = vector.shape_cast %87 : vector<1x1x8x8xbf16> to vector<8x8xbf16>
    %cst_112 = arith.constant dense<0.000000e+00> : vector<64x8xf32>
    %89 = tpu.matmul %86, %88, %cst_112 {dimension_numbers = #tpu.dot_dimension_numbers<[1], [0], [0], [1], [0, 0, 1, 1], [], []>} : vector<64x8xbf16>, vector<8x8xbf16>, vector<64x8xf32> -> vector<64x8xf32>
    %90 = arith.addf %83, %89 : vector<64x8xf32>
    %c1_113 = arith.constant 1 : index
    %c1_114 = arith.constant 1 : index
    %c0_115 = arith.constant 0 : index
    %c0_116 = arith.constant 0 : index
    %c0_117 = arith.constant 0 : index
    %91 = vector.load %arg9[%c1_113, %c1_114, %c0_115, %c0_116, %c0_117] : memref<2x2x9x9x8xbf16, #tpu.memory_space<vmem>>, vector<1x1x8x8x8xbf16>
    %92 = vector.shape_cast %91 : vector<1x1x8x8x8xbf16> to vector<8x8x8xbf16>
    %93 = vector.shape_cast %92 : vector<8x8x8xbf16> to vector<64x8xbf16>
    %c1_118 = arith.constant 1 : index
    %c1_119 = arith.constant 1 : index
    %c0_120 = arith.constant 0 : index
    %c0_121 = arith.constant 0 : index
    %94 = vector.load %arg4[%c1_118, %c1_119, %c0_120, %c0_121] : memref<3x3x8x8xbf16, #tpu.memory_space<vmem>>, vector<1x1x8x8xbf16>
    %95 = vector.shape_cast %94 : vector<1x1x8x8xbf16> to vector<8x8xbf16>
    %cst_122 = arith.constant dense<0.000000e+00> : vector<64x8xf32>
    %96 = tpu.matmul %93, %95, %cst_122 {dimension_numbers = #tpu.dot_dimension_numbers<[1], [0], [0], [1], [0, 0, 1, 1], [], []>} : vector<64x8xbf16>, vector<8x8xbf16>, vector<64x8xf32> -> vector<64x8xf32>
    %97 = arith.addf %90, %96 : vector<64x8xf32>
    %c1_123 = arith.constant 1 : index
    %c0_124 = arith.constant 0 : index
    %c0_125 = arith.constant 0 : index
    %c1_126 = arith.constant 1 : index
    %c0_127 = arith.constant 0 : index
    %98 = vector.load %arg9[%c1_123, %c0_124, %c0_125, %c1_126, %c0_127] : memref<2x2x9x9x8xbf16, #tpu.memory_space<vmem>>, vector<1x1x8x8x8xbf16>
    %99 = vector.shape_cast %98 : vector<1x1x8x8x8xbf16> to vector<8x8x8xbf16>
    %100 = vector.shape_cast %99 : vector<8x8x8xbf16> to vector<64x8xbf16>
    %c1_128 = arith.constant 1 : index
    %c2_129 = arith.constant 2 : index
    %c0_130 = arith.constant 0 : index
    %c0_131 = arith.constant 0 : index
    %101 = vector.load %arg4[%c1_128, %c2_129, %c0_130, %c0_131] : memref<3x3x8x8xbf16, #tpu.memory_space<vmem>>, vector<1x1x8x8xbf16>
    %102 = vector.shape_cast %101 : vector<1x1x8x8xbf16> to vector<8x8xbf16>
    %cst_132 = arith.constant dense<0.000000e+00> : vector<64x8xf32>
    %103 = tpu.matmul %100, %102, %cst_132 {dimension_numbers = #tpu.dot_dimension_numbers<[1], [0], [0], [1], [0, 0, 1, 1], [], []>} : vector<64x8xbf16>, vector<8x8xbf16>, vector<64x8xf32> -> vector<64x8xf32>
    %104 = arith.addf %97, %103 : vector<64x8xf32>
    %c0_133 = arith.constant 0 : index
    %c0_134 = arith.constant 0 : index
    %c1_135 = arith.constant 1 : index
    %c0_136 = arith.constant 0 : index
    %c0_137 = arith.constant 0 : index
    %105 = vector.load %arg9[%c0_133, %c0_134, %c1_135, %c0_136, %c0_137] : memref<2x2x9x9x8xbf16, #tpu.memory_space<vmem>>, vector<1x1x8x8x8xbf16>
    %106 = vector.shape_cast %105 : vector<1x1x8x8x8xbf16> to vector<8x8x8xbf16>
    %107 = vector.shape_cast %106 : vector<8x8x8xbf16> to vector<64x8xbf16>
    %c2_138 = arith.constant 2 : index
    %c0_139 = arith.constant 0 : index
    %c0_140 = arith.constant 0 : index
    %c0_141 = arith.constant 0 : index
    %108 = vector.load %arg4[%c2_138, %c0_139, %c0_140, %c0_141] : memref<3x3x8x8xbf16, #tpu.memory_space<vmem>>, vector<1x1x8x8xbf16>
    %109 = vector.shape_cast %108 : vector<1x1x8x8xbf16> to vector<8x8xbf16>
    %cst_142 = arith.constant dense<0.000000e+00> : vector<64x8xf32>
    %110 = tpu.matmul %107, %109, %cst_142 {dimension_numbers = #tpu.dot_dimension_numbers<[1], [0], [0], [1], [0, 0, 1, 1], [], []>} : vector<64x8xbf16>, vector<8x8xbf16>, vector<64x8xf32> -> vector<64x8xf32>
    %111 = arith.addf %104, %110 : vector<64x8xf32>
    %c0_143 = arith.constant 0 : index
    %c1_144 = arith.constant 1 : index
    %c1_145 = arith.constant 1 : index
    %c0_146 = arith.constant 0 : index
    %c0_147 = arith.constant 0 : index
    %112 = vector.load %arg9[%c0_143, %c1_144, %c1_145, %c0_146, %c0_147] : memref<2x2x9x9x8xbf16, #tpu.memory_space<vmem>>, vector<1x1x8x8x8xbf16>
    %113 = vector.shape_cast %112 : vector<1x1x8x8x8xbf16> to vector<8x8x8xbf16>
    %114 = vector.shape_cast %113 : vector<8x8x8xbf16> to vector<64x8xbf16>
    %c2_148 = arith.constant 2 : index
    %c1_149 = arith.constant 1 : index
    %c0_150 = arith.constant 0 : index
    %c0_151 = arith.constant 0 : index
    %115 = vector.load %arg4[%c2_148, %c1_149, %c0_150, %c0_151] : memref<3x3x8x8xbf16, #tpu.memory_space<vmem>>, vector<1x1x8x8xbf16>
    %116 = vector.shape_cast %115 : vector<1x1x8x8xbf16> to vector<8x8xbf16>
    %cst_152 = arith.constant dense<0.000000e+00> : vector<64x8xf32>
    %117 = tpu.matmul %114, %116, %cst_152 {dimension_numbers = #tpu.dot_dimension_numbers<[1], [0], [0], [1], [0, 0, 1, 1], [], []>} : vector<64x8xbf16>, vector<8x8xbf16>, vector<64x8xf32> -> vector<64x8xf32>
    %118 = arith.addf %111, %117 : vector<64x8xf32>
    %c0_153 = arith.constant 0 : index
    %c0_154 = arith.constant 0 : index
    %c1_155 = arith.constant 1 : index
    %c1_156 = arith.constant 1 : index
    %c0_157 = arith.constant 0 : index
    %119 = vector.load %arg9[%c0_153, %c0_154, %c1_155, %c1_156, %c0_157] : memref<2x2x9x9x8xbf16, #tpu.memory_space<vmem>>, vector<1x1x8x8x8xbf16>
    %120 = vector.shape_cast %119 : vector<1x1x8x8x8xbf16> to vector<8x8x8xbf16>
    %121 = vector.shape_cast %120 : vector<8x8x8xbf16> to vector<64x8xbf16>
    %c2_158 = arith.constant 2 : index
    %c2_159 = arith.constant 2 : index
    %c0_160 = arith.constant 0 : index
    %c0_161 = arith.constant 0 : index
    %122 = vector.load %arg4[%c2_158, %c2_159, %c0_160, %c0_161] : memref<3x3x8x8xbf16, #tpu.memory_space<vmem>>, vector<1x1x8x8xbf16>
    %123 = vector.shape_cast %122 : vector<1x1x8x8xbf16> to vector<8x8xbf16>
    %cst_162 = arith.constant dense<0.000000e+00> : vector<64x8xf32>
    %124 = tpu.matmul %121, %123, %cst_162 {dimension_numbers = #tpu.dot_dimension_numbers<[1], [0], [0], [1], [0, 0, 1, 1], [], []>} : vector<64x8xbf16>, vector<8x8xbf16>, vector<64x8xf32> -> vector<64x8xf32>
    %125 = arith.addf %118, %124 : vector<64x8xf32>
    %c0_163 = arith.constant 0 : index
    %c0_164 = arith.constant 0 : index
    %126 = vector.load %arg5[%c0_163, %c0_164] : memref<1x8xf32, #tpu.memory_space<vmem>>, vector<1x8xf32>
    %127 = vector.broadcast %126 : vector<1x8xf32> to vector<64x8xf32>
    %128 = arith.addf %125, %127 : vector<64x8xf32>
    %cst_165 = arith.constant 0.000000e+00 : f32
    %129 = vector.broadcast %cst_165 : f32 to vector<64x8xf32>
    %130 = arith.maximumf %128, %129 : vector<64x8xf32>
    %131 = arith.truncf %130 : vector<64x8xf32> to vector<64x8xbf16>
    %c0_166 = arith.constant 0 : index
    %c0_167 = arith.constant 0 : index
    %c0_168 = arith.constant 0 : index
    %132 = vector.load %arg1[%c0_166, %c0_167, %c0_168] : memref<1x256x4xbf16, #tpu.memory_space<vmem>>, vector<1x64x4xbf16>
    %133 = vector.shape_cast %132 : vector<1x64x4xbf16> to vector<64x4xbf16>
    %134 = tpu.concatenate %131, %133 in 1 : vector<64x8xbf16>, vector<64x4xbf16> -> vector<64x12xbf16>
    %c0_169 = arith.constant 0 : index
    %c0_170 = arith.constant 0 : index
    %135 = vector.load %arg6[%c0_169, %c0_170] : memref<12x8xbf16, #tpu.memory_space<vmem>>, vector<12x8xbf16>
    %cst_171 = arith.constant dense<0.000000e+00> : vector<64x8xf32>
    %136 = tpu.matmul %134, %135, %cst_171 {dimension_numbers = #tpu.dot_dimension_numbers<[1], [0], [0], [1], [0, 0, 1, 1], [], []>} : vector<64x12xbf16>, vector<12x8xbf16>, vector<64x8xf32> -> vector<64x8xf32>
    %c0_172 = arith.constant 0 : index
    %c0_173 = arith.constant 0 : index
    %137 = vector.load %arg7[%c0_172, %c0_173] : memref<1x8xf32, #tpu.memory_space<vmem>>, vector<1x8xf32>
    %138 = vector.broadcast %137 : vector<1x8xf32> to vector<64x8xf32>
    %139 = arith.addf %136, %138 : vector<64x8xf32>
    %cst_174 = arith.constant 0.000000e+00 : f32
    %140 = vector.broadcast %cst_174 : f32 to vector<64x8xf32>
    %141 = arith.maximumf %139, %140 : vector<64x8xf32>
    %c0_175 = arith.constant 0 : index
    %c0_176 = arith.constant 0 : index
    %c0_177 = arith.constant 0 : index
    %142 = vector.load %arg8[%c0_175, %c0_176, %c0_177] : memref<1x64x8xf32, #tpu.memory_space<vmem>>, vector<1x64x8xf32>
    %143 = vector.shape_cast %142 : vector<1x64x8xf32> to vector<64x8xf32>
    %144 = vector.shape_cast %141 : vector<64x8xf32> to vector<1x64x8xf32>
    tpu.vector_store %arg8[%c0_175, %c0_176, %c0_177], %144 {strides = array<i32>} : memref<1x64x8xf32, #tpu.memory_space<vmem>>, vector<1x64x8xf32>,
    return
  }
  func.func @transform_0(%arg0: i32) -> (i32, i32, i32) {
    %c0_i32 = arith.constant 0 : i32
    %c0_i32_0 = arith.constant 0 : i32
    %c0_i32_1 = arith.constant 0 : i32
    return %arg0, %c0_i32, %c0_i32_0 : i32, i32, i32
  }
  func.func @transform_1(%arg0: i32) -> (i32, i32) {
    %c0_i32 = arith.constant 0 : i32
    %c0_i32_0 = arith.constant 0 : i32
    %c0_i32_1 = arith.constant 0 : i32
    return %c0_i32, %c0_i32_0 : i32, i32
  }
  func.func @transform_2(%arg0: i32) -> (i32, i32) {
    %c0_i32 = arith.constant 0 : i32
    %c0_i32_0 = arith.constant 0 : i32
    %c0_i32_1 = arith.constant 0 : i32
    return %c0_i32, %c0_i32_0 : i32, i32
  }
  func.func @transform_3(%arg0: i32) -> (i32, i32, i32, i32) {
    %c0_i32 = arith.constant 0 : i32
    %c0_i32_0 = arith.constant 0 : i32
    %c0_i32_1 = arith.constant 0 : i32
    %c0_i32_2 = arith.constant 0 : i32
    %c0_i32_3 = arith.constant 0 : i32
    return %c0_i32, %c0_i32_0, %c0_i32_1, %c0_i32_2 : i32, i32, i32, i32
  }
  func.func @transform_4(%arg0: i32) -> (i32, i32) {
    %c0_i32 = arith.constant 0 : i32
    %c0_i32_0 = arith.constant 0 : i32
    %c0_i32_1 = arith.constant 0 : i32
    return %c0_i32, %c0_i32_0 : i32, i32
  }
  func.func @transform_5(%arg0: i32) -> (i32, i32) {
    %c0_i32 = arith.constant 0 : i32
    %c0_i32_0 = arith.constant 0 : i32
    %c0_i32_1 = arith.constant 0 : i32
    return %c0_i32, %c0_i32_0 : i32, i32
  }
  func.func @transform_6(%arg0: i32) -> (i32, i32) {
    %c0_i32 = arith.constant 0 : i32
    %c0_i32_0 = arith.constant 0 : i32
    %c0_i32_1 = arith.constant 0 : i32
    return %c0_i32, %c0_i32_0 : i32, i32
  }
  func.func @transform_7(%arg0: i32) -> (i32, i32, i32) {
    %c0_i32 = arith.constant 0 : i32
    %c0_i32_0 = arith.constant 0 : i32
    %c0_i32_1 = arith.constant 0 : i32
    return %arg0, %c0_i32, %c0_i32_0 : i32, i32, i32
  }
}

</mosaic_0001>

<llo_original>
// kernel: tpu_custom_call.1
$region0: #{tpu_custom_call.1}
  #allocation0 [shape = 'u32[]', space=smem, size = 0x4, offset = 0x4, fixed_abs, tag = 'smem constant byte address 0x4 - core index']
  #allocation1 [shape = 'u32[144,128]{1,0:T(1,128)}', space=vmem, size = 0x12000, scoped, tag = 'internal scratch']
  #allocation2 [shape = 'bf16[2,2,9,9,8]{4,3,2,1,0:T(8,128)(2,1)}', space=vmem, size = 0x24000, scoped, tag = 'scratch operand']
  %s0 = inlined_call_operand.vmem [shape: bf16[2,256,4], index: 0, kind: input, shape index: {}]
  %s1 = inlined_call_operand.vmem [shape: bf16[4,8], index: 1, kind: input, shape index: {}]
  %s2 = inlined_call_operand.vmem [shape: f32[1,8], index: 2, kind: input, shape index: {}]
  %s3 = inlined_call_operand.vmem [shape: bf16[3,3,8,8], index: 3, kind: input, shape index: {}]
  %s4 = inlined_call_operand.vmem [shape: f32[1,8], index: 4, kind: input, shape index: {}]
  %s5 = inlined_call_operand.vmem [shape: bf16[12,8], index: 5, kind: input, shape index: {}]
  %s6 = inlined_call_operand.vmem [shape: f32[1,8], index: 6, kind: input, shape index: {}]
  %s7 = inlined_call_operand.vmem [shape: f32[2,64,8], index: 7, kind: output, shape index: {}]
  %s8 = sld [smem:[#allocation0]]
  $region61: #{tpu_custom_call.1} parent=0
    _
  %s10 = ssub.s32 1, %s8
  %s11 = scalar_select 0, %s10, %s8
  loop: start=0, step=1, limit=4
  $region2: #{tpu_custom_call.1} parent=0 // loop_pre_header
    _
  $region3: #{tpu_custom_call.1} parent=0 // loop_header
    %s13 = sphi 0, %s17
    %p14 = scmp.ge.s32.totalorder %s13, 4
    %s23 = sphi 0, %s25
    %s26 = sphi 0, %s23
    %s27 = sphi 0, %s26
    %s43 = sphi 0, %s27
    %s47 = sphi 0, %s47
    %s49 = sphi 0, %s47
    %s50 = sphi 0, %s49
    %s64 = sphi 0, %s50
    %s68 = sphi 0, %s68
    %s70 = sphi 0, %s68
    %s71 = sphi 0, %s70
    %s85 = sphi 0, %s71
    %s89 = sphi 0, %s89
    %s91 = sphi 0, %s89
    %s92 = sphi 0, %s91
    %s106 = sphi 0, %s92
    %s110 = sphi 0, %s110
    %s112 = sphi 0, %s110
    %s113 = sphi 0, %s112
    %s127 = sphi 0, %s113
    %s131 = sphi 0, %s131
    %s133 = sphi 0, %s131
    %s134 = sphi 0, %s133
    %s148 = sphi 0, %s134
    %s152 = sphi 0, %s152
    %s154 = sphi 0, %s152
    %s155 = sphi 0, %s154
    %s169 = sphi 0, %s155
    %s175 = sphi 0, %s177
    %s178 = sphi 0, %s175
    %s179 = sphi 0, %s178
    %s195 = sphi 0, %s179
  $region4: #{tpu_custom_call.1} parent=0 // loop_header_branch
    %16 = sbr.rel (%p14) target = $region8
  $region5: #{tpu_custom_call.1} parent=0 // loop_body
    %s18 = ssub.s32 %s13, 1
    %s19 = ssub.s32 %s13, 2
    %s20 = sadd.s32 %s13, 1
    %s21 = ssub.s32 %s13, %s20
    %p22 = scmp.eq.s32.totalorder %s21, 0
    %s24 = sadd.s32 %s23, 1
    %s25 = scalar_select %p22, %s23, %s24
    %p28 = pneg %p22
    %p29 = scmp.eq.s32.totalorder %s13, 1
    %p30 = por %p28, %p29
    %p31 = scmp.ne.s32.totalorder %s23, %s26
    %p32 = scmp.eq.s32.totalorder %s13, 0
    %p33 = por %p31, %p32
    %p34 = scmp.ne.s32.totalorder %s23, %s26
    %p35 = scmp.eq.s32.totalorder %s18, 1
    %p36 = por %p34, %p35
    %p37 = scmp.ne.s32.totalorder %s26, %s27
    %p38 = scmp.eq.s32.totalorder %s18, 0
    %p39 = por %p37, %p38
    %p40 = scmp.ne.s32.totalorder %s26, %s27
    %p41 = scmp.eq.s32.totalorder %s19, 1
    %p42 = por %p40, %p41
    %p44 = scmp.ne.s32.totalorder %s27, %s43
    %p45 = scmp.eq.s32.totalorder %s19, 0
    %p46 = por %p44, %p45
    %s48 = sadd.s32 %s47, 1
    %p51 = scmp.eq.s32.totalorder %s13, 1
    %p52 = scmp.ne.s32.totalorder %s47, %s49
    %p53 = scmp.eq.s32.totalorder %s13, 0
    %p54 = por %p52, %p53
    %p55 = scmp.ne.s32.totalorder %s47, %s49
    %p56 = scmp.eq.s32.totalorder %s18, 1
    %p57 = por %p55, %p56
    %p58 = scmp.ne.s32.totalorder %s49, %s50
    %p59 = scmp.eq.s32.totalorder %s18, 0
    %p60 = por %p58, %p59
    %p61 = scmp.ne.s32.totalorder %s49, %s50
    %p62 = scmp.eq.s32.totalorder %s19, 1
    %p63 = por %p61, %p62
    %p65 = scmp.ne.s32.totalorder %s50, %s64
    %p66 = scmp.eq.s32.totalorder %s19, 0
    %p67 = por %p65, %p66
    %s69 = sadd.s32 %s68, 1
    %p72 = scmp.eq.s32.totalorder %s13, 1
    %p73 = scmp.ne.s32.totalorder %s68, %s70
    %p74 = scmp.eq.s32.totalorder %s13, 0
    %p75 = por %p73, %p74
    %p76 = scmp.ne.s32.totalorder %s68, %s70
    %p77 = scmp.eq.s32.totalorder %s18, 1
    %p78 = por %p76, %p77
    %p79 = scmp.ne.s32.totalorder %s70, %s71
    %p80 = scmp.eq.s32.totalorder %s18, 0
    %p81 = por %p79, %p80
    %p82 = scmp.ne.s32.totalorder %s70, %s71
    %p83 = scmp.eq.s32.totalorder %s19, 1
    %p84 = por %p82, %p83
    %p86 = scmp.ne.s32.totalorder %s71, %s85
    %p87 = scmp.eq.s32.totalorder %s19, 0
    %p88 = por %p86, %p87
    %s90 = sadd.s32 %s89, 1
    %p93 = scmp.eq.s32.totalorder %s13, 1
    %p94 = scmp.ne.s32.totalorder %s89, %s91
    %p95 = scmp.eq.s32.totalorder %s13, 0
    %p96 = por %p94, %p95
    %p97 = scmp.ne.s32.totalorder %s89, %s91
    %p98 = scmp.eq.s32.totalorder %s18, 1
    %p99 = por %p97, %p98
    %p100 = scmp.ne.s32.totalorder %s91, %s92
    %p101 = scmp.eq.s32.totalorder %s18, 0
    %p102 = por %p100, %p101
    %p103 = scmp.ne.s32.totalorder %s91, %s92
    %p104 = scmp.eq.s32.totalorder %s19, 1
    %p105 = por %p103, %p104
    %p107 = scmp.ne.s32.totalorder %s92, %s106
    %p108 = scmp.eq.s32.totalorder %s19, 0
    %p109 = por %p107, %p108
    %s111 = sadd.s32 %s110, 1
    %p114 = scmp.eq.s32.totalorder %s13, 1
    %p115 = scmp.ne.s32.totalorder %s110, %s112
    %p116 = scmp.eq.s32.totalorder %s13, 0
    %p117 = por %p115, %p116
    %p118 = scmp.ne.s32.totalorder %s110, %s112
    %p119 = scmp.eq.s32.totalorder %s18, 1
    %p120 = por %p118, %p119
    %p121 = scmp.ne.s32.totalorder %s112, %s113
    %p122 = scmp.eq.s32.totalorder %s18, 0
    %p123 = por %p121, %p122
    %p124 = scmp.ne.s32.totalorder %s112, %s113
    %p125 = scmp.eq.s32.totalorder %s19, 1
    %p126 = por %p124, %p125
    %p128 = scmp.ne.s32.totalorder %s113, %s127
    %p129 = scmp.eq.s32.totalorder %s19, 0
    %p130 = por %p128, %p129
    %s132 = sadd.s32 %s131, 1
    %p135 = scmp.eq.s32.totalorder %s13, 1
    %p136 = scmp.ne.s32.totalorder %s131, %s133
    %p137 = scmp.eq.s32.totalorder %s13, 0
    %p138 = por %p136, %p137
    %p139 = scmp.ne.s32.totalorder %s131, %s133
    %p140 = scmp.eq.s32.totalorder %s18, 1
    %p141 = por %p139, %p140
    %p142 = scmp.ne.s32.totalorder %s133, %s134
    %p143 = scmp.eq.s32.totalorder %s18, 0
    %p144 = por %p142, %p143
    %p145 = scmp.ne.s32.totalorder %s133, %s134
    %p146 = scmp.eq.s32.totalorder %s19, 1
    %p147 = por %p145, %p146
    %p149 = scmp.ne.s32.totalorder %s134, %s148
    %p150 = scmp.eq.s32.totalorder %s19, 0
    %p151 = por %p149, %p150
    %s153 = sadd.s32 %s152, 1
    %p156 = scmp.eq.s32.totalorder %s13, 1
    %p157 = scmp.ne.s32.totalorder %s152, %s154
    %p158 = scmp.eq.s32.totalorder %s13, 0
    %p159 = por %p157, %p158
    %p160 = scmp.ne.s32.totalorder %s152, %s154
    %p161 = scmp.eq.s32.totalorder %s18, 1
    %p162 = por %p160, %p161
    %p163 = scmp.ne.s32.totalorder %s154, %s155
    %p164 = scmp.eq.s32.totalorder %s18, 0
    %p165 = por %p163, %p164
    %p166 = scmp.ne.s32.totalorder %s154, %s155
    %p167 = scmp.eq.s32.totalorder %s19, 1
    %p168 = por %p166, %p167
    %p170 = scmp.ne.s32.totalorder %s155, %s169
    %p171 = scmp.eq.s32.totalorder %s19, 0
    %p172 = por %p170, %p171
    %s173 = ssub.s32 %s13, %s20
    %p174 = scmp.eq.s32.totalorder %s173, 0
    %s176 = sadd.s32 %s175, 1
    %s177 = scalar_select %p174, %s175, %s176
    %p180 = pneg %p174
    %p181 = scmp.eq.s32.totalorder %s13, 1
    %p182 = por %p180, %p181
    %p183 = scmp.ne.s32.totalorder %s175, %s178
    %p184 = scmp.eq.s32.totalorder %s13, 0
    %p185 = por %p183, %p184
    %p186 = scmp.ne.s32.totalorder %s175, %s178
    %p187 = scmp.eq.s32.totalorder %s18, 1
    %p188 = por %p186, %p187
    %p189 = scmp.ne.s32.totalorder %s178, %s179
    %p190 = scmp.eq.s32.totalorder %s18, 0
    %p191 = por %p189, %p190
    %p192 = scmp.ne.s32.totalorder %s178, %s179
    %p193 = scmp.eq.s32.totalorder %s19, 1
    %p194 = por %p192, %p193
    %p196 = scmp.ne.s32.totalorder %s179, %s195
    %p197 = scmp.eq.s32.totalorder %s19, 0
    %p198 = por %p196, %p197
    %p199 = scmp.le.s32.totalorder 1, %s13
    %p200 = scmp.lt.s32.totalorder %s13, 3
    %p201 = pnand %p199, %p200
    %p202 = pneg %p201
    // Predicated region
    $region9: #{tpu_custom_call.1} parent=5 // pred_check
      _
    $region10: #{tpu_custom_call.1} parent=5 // pred_check_branch
      %204 = sbr.rel (%p201) target = $region12
    $region11: #{tpu_custom_call.1} parent=5 // pred_region
      %s205 = ssub.s32 %s13, 1
      // Predicated region
      $region13: #{tpu_custom_call.1} parent=11 // pred_check
        %p206 = pneg %p60
      $region14: #{tpu_custom_call.1} parent=11 // pred_check_branch
        %208 = sbr.rel (%p206) target = $region16
      $region15: #{tpu_custom_call.1} parent=11 // pred_region
        _
      $region16: #{tpu_custom_call.1} parent=11 // pred_fallthru
        _
      // Predicated region
      $region17: #{tpu_custom_call.1} parent=11 // pred_check
        %p209 = pneg %p81
      $region18: #{tpu_custom_call.1} parent=11 // pred_check_branch
        %211 = sbr.rel (%p209) target = $region20
      $region19: #{tpu_custom_call.1} parent=11 // pred_region
        _
      $region20: #{tpu_custom_call.1} parent=11 // pred_fallthru
        _
      // Predicated region
      $region21: #{tpu_custom_call.1} parent=11 // pred_check
        %p212 = pneg %p102
      $region22: #{tpu_custom_call.1} parent=11 // pred_check_branch
        %214 = sbr.rel (%p212) target = $region24
      $region23: #{tpu_custom_call.1} parent=11 // pred_region
        _
      $region24: #{tpu_custom_call.1} parent=11 // pred_fallthru
        _
      // Predicated region
      $region25: #{tpu_custom_call.1} parent=11 // pred_check
        %p215 = pneg %p123
      $region26: #{tpu_custom_call.1} parent=11 // pred_check_branch
        %217 = sbr.rel (%p215) target = $region28
      $region27: #{tpu_custom_call.1} parent=11 // pred_region
        _
      $region28: #{tpu_custom_call.1} parent=11 // pred_fallthru
        _
      // Predicated region
      $region29: #{tpu_custom_call.1} parent=11 // pred_check
        %p218 = pneg %p144
      $region30: #{tpu_custom_call.1} parent=11 // pred_check_branch
        %220 = sbr.rel (%p218) target = $region32
      $region31: #{tpu_custom_call.1} parent=11 // pred_region
        _
      $region32: #{tpu_custom_call.1} parent=11 // pred_fallthru
        _
      // Predicated region
      $region33: #{tpu_custom_call.1} parent=11 // pred_check
        %p221 = pneg %p165
      $region34: #{tpu_custom_call.1} parent=11 // pred_check_branch
        %223 = sbr.rel (%p221) target = $region36
      $region35: #{tpu_custom_call.1} parent=11 // pred_region
        _
      $region36: #{tpu_custom_call.1} parent=11 // pred_fallthru
        _
    $region12: #{tpu_custom_call.1} parent=5 // pred_fallthru
      _
    %p224 = scmp.lt.s32.totalorder %s13, 2
    // Predicated region
    $region37: #{tpu_custom_call.1} parent=5 // pred_check
      %p225 = pneg %p224
    $region38: #{tpu_custom_call.1} parent=5 // pred_check_branch
      %227 = sbr.rel (%p225) target = $region40
    $region39: #{tpu_custom_call.1} parent=5 // pred_region
      // Predicated region
      $region41: #{tpu_custom_call.1} parent=39 // pred_check
        %p228 = pneg %p33
      $region42: #{tpu_custom_call.1} parent=39 // pred_check_branch
        %230 = sbr.rel (%p228) target = $region44
      $region43: #{tpu_custom_call.1} parent=39 // pred_region
        %p231 = scmp.lt.s32.totalorder %s13, 1
        %s232 = scalar_select %p231, %s13, 1
        %s233 = smul.addr %s232, 32
        %s234 = smul.addr %s233, 4
        %s235 = scalar_lea.vmem %s0, %s234
      $region44: #{tpu_custom_call.1} parent=39 // pred_fallthru
        _
    $region40: #{tpu_custom_call.1} parent=5 // pred_fallthru
      _
    %p236 = scmp.le.s32.totalorder 1, %s13
    %p237 = scmp.lt.s32.totalorder %s13, 3
    %p238 = pnand %p236, %p237
    %p239 = pneg %p238
    // Predicated region
    $region45: #{tpu_custom_call.1} parent=5 // pred_check
      _
    $region46: #{tpu_custom_call.1} parent=5 // pred_check_branch
      %241 = sbr.rel (%p238) target = $region48
    $region47: #{tpu_custom_call.1} parent=5 // pred_region
      %s242 = ssub.s32 %s13, 1
      %p243 = scmp.lt.s32.totalorder %s18, 1
      %s244 = scalar_select %p243, %s18, 1
      %s245 = smul.addr %s244, 32
      %s246 = smul.addr %s245, 4
      %s247 = scalar_lea.vmem %s0, %s246
      %p248 = pneg %p39
      %p249 = pneg %p36
      %p250 = pneg %p60
      %p251 = pneg %p57
      %p252 = pneg %p81
      %p253 = pneg %p78
      %p254 = pneg %p102
      %p255 = pneg %p99
      %p256 = pneg %p123
      %p257 = pneg %p120
      %p258 = pneg %p144
      %p259 = pneg %p141
      %p260 = pneg %p165
      %p261 = pneg %p162
      %p262 = pneg %p191
      %p263 = pneg %p188
      %p264 = scmp.lt.s32.totalorder %s18, 1
      %s265 = scalar_select %p264, %s18, 1
      %s266 = smul.addr %s265, 8
      %s267 = smul.addr %s266, 8
      %s268 = scalar_lea.vmem %s7, %s267
      %p269 = scmp.lt.s32.totalorder %s18, 1
      %s270 = scalar_select %p269, %s18, 1
      %s271 = smul.addr %s270, 32
      %s272 = smul.addr %s271, 4
      %s273 = scalar_lea.vmem %s0, %s272
      %p274 = scmp.lt.s32.totalorder %s18, 1
      %s275 = scalar_select %p274, %s18, 1
      %s276 = smul.addr %s275, 8
      %s277 = smul.addr %s276, 8
      %s278 = scalar_lea.vmem %s7, %s277
      %v280 = vld [vmem:[%s273] sm:$0xf]
      %v281 = vld [vmem:[%s273 + $0x4] sm:$0xf]
      %v282 = vld [vmem:[%s273 + $0x8] sm:$0xf]
      %v283 = vld [vmem:[%s273 + $0xc] sm:$0xf]
      %v284 = vld [vmem:[%s273 + $0x10] sm:$0xf]
      %v285 = vld [vmem:[%s273 + $0x14] sm:$0xf]
      %v286 = vld [vmem:[%s273 + $0x18] sm:$0xf]
      %v287 = vld [vmem:[%s273 + $0x1c] sm:$0xf]
      %v288 = vld [vmem:[%s273 + $0x20] sm:$0xf]
      %v289 = vld [vmem:[%s273 + $0x24] sm:$0xf]
      %v290 = vld [vmem:[%s273 + $0x28] sm:$0xf]
      %v291 = vld [vmem:[%s273 + $0x2c] sm:$0xf]
      %v292 = vld [vmem:[%s273 + $0x30] sm:$0xf]
      %v293 = vld [vmem:[%s273 + $0x34] sm:$0xf]
      %v294 = vld [vmem:[%s273 + $0x38] sm:$0xf]
      %v295 = vld [vmem:[%s273 + $0x3c] sm:$0xf]
      %v296 = vld [vmem:[%s273 + $0x40] sm:$0xf]
      %v297 = vld [vmem:[%s273 + $0x44] sm:$0xf]
      %v298 = vld [vmem:[%s273 + $0x48] sm:$0xf]
      %v299 = vld [vmem:[%s273 + $0x4c] sm:$0xf]
      %v300 = vld [vmem:[%s273 + $0x50] sm:$0xf]
      %v301 = vld [vmem:[%s273 + $0x54] sm:$0xf]
      %v302 = vld [vmem:[%s273 + $0x58] sm:$0xf]
      %v303 = vld [vmem:[%s273 + $0x5c] sm:$0xf]
      %v304 = vld [vmem:[%s273 + $0x60] sm:$0xf]
      %v305 = vld [vmem:[%s273 + $0x64] sm:$0xf]
      %v306 = vld [vmem:[%s273 + $0x68] sm:$0xf]
      %v307 = vld [vmem:[%s273 + $0x6c] sm:$0xf]
      %v308 = vld [vmem:[%s273 + $0x70] sm:$0xf]
      %v309 = vld [vmem:[%s273 + $0x74] sm:$0xf]
      %v310 = vld [vmem:[%s273 + $0x78] sm:$0xf]
      %v311 = vld [vmem:[%s273 + $0x7c] sm:$0xf]
      %v312 = vld [vmem:[%s1] sm:$0x3]
      %v313 = vld [vmem:[%s2] sm:$0x1]
      %v315 = vlaneseq
      %v316 = vshrl.u32 %v315, 7
      %v317 = vsub.s32 0, %v316
      %v318 = vrot.slane %v313, %v317
      %v352 = vunpack.c.l.b16 %v280
      %v353 = vunpack.c.l.b16 %v281
      %v354 = vunpack.c.l.b16 %v282
      %v355 = vunpack.c.l.b16 %v283
      %v356 = vunpack.c.l.b16 %v284
      %v357 = vunpack.c.l.b16 %v285
      %v358 = vunpack.c.l.b16 %v286
      %v359 = vunpack.c.l.b16 %v287
      %v360 = vunpack.c.l.b16 %v288
      %v361 = vunpack.c.l.b16 %v289
      %v362 = vunpack.c.l.b16 %v290
      %v363 = vunpack.c.l.b16 %v291
      %v364 = vunpack.c.l.b16 %v292
      %v365 = vunpack.c.l.b16 %v293
      %v366 = vunpack.c.l.b16 %v294
      %v367 = vunpack.c.l.b16 %v295
      %v368 = vunpack.c.l.b16 %v296
      %v369 = vunpack.c.l.b16 %v297
      %v370 = vunpack.c.l.b16 %v298
      %v371 = vunpack.c.l.b16 %v299
      %v372 = vunpack.c.l.b16 %v300
      %v373 = vunpack.c.l.b16 %v301
      %v374 = vunpack.c.l.b16 %v302
      %v375 = vunpack.c.l.b16 %v303
      %v376 = vunpack.c.l.b16 %v304
      %v377 = vunpack.c.l.b16 %v305
      %v378 = vunpack.c.l.b16 %v306
      %v379 = vunpack.c.l.b16 %v307
      %v380 = vunpack.c.l.b16 %v308
      %v381 = vunpack.c.l.b16 %v309
      %v382 = vunpack.c.l.b16 %v310
      %v383 = vunpack.c.l.b16 %v311
      %v384 = vpack.c.b16 %v353, %v352
      %v385 = vpack.c.b16 %v355, %v354
      %v386 = vpack.c.b16 %v357, %v356
      %v387 = vpack.c.b16 %v359, %v358
      %v388 = vpack.c.b16 %v361, %v360
      %v389 = vpack.c.b16 %v363, %v362
      %v390 = vpack.c.b16 %v365, %v364
      %v391 = vpack.c.b16 %v367, %v366
      %v392 = vpack.c.b16 %v369, %v368
      %v393 = vpack.c.b16 %v371, %v370
      %v394 = vpack.c.b16 %v373, %v372
      %v395 = vpack.c.b16 %v375, %v374
      %v396 = vpack.c.b16 %v377, %v376
      %v397 = vpack.c.b16 %v379, %v378
      %v398 = vpack.c.b16 %v381, %v380
      %v399 = vpack.c.b16 %v383, %v382
      %vm400 = vcmask 31744
      %v402 = vsel %vm400, %v384, 0
      %v405 = vsel %vm400, %v385, 0
      %v408 = vsel %vm400, %v386, 0
      %v411 = vsel %vm400, %v387, 0
      %v414 = vsel %vm400, %v388, 0
      %v417 = vsel %vm400, %v389, 0
      %v420 = vsel %vm400, %v390, 0
      %v423 = vsel %vm400, %v391, 0
      %v426 = vsel %vm400, %v392, 0
      %v429 = vsel %vm400, %v393, 0
      %v432 = vsel %vm400, %v394, 0
      %v435 = vsel %vm400, %v395, 0
      %v438 = vsel %vm400, %v396, 0
      %v441 = vsel %vm400, %v397, 0
      %v444 = vsel %vm400, %v398, 0
      %v447 = vsel %vm400, %v399, 0
      %vm449 = vcmask 1041408
      %v451 = vsel %vm449, %v312, 0
      %453 = vmatprep.subr.bf16.mxu0 0
      %454 = vmatpush1.bf16.msra.mxu0 0
      %455 = vmatprep.subr.bf16.mxu0 0
      %456 = vmatpush1.bf16.msra.mxu0 0
      %457 = vmatprep.subr.bf16.mxu0 0
      %458 = vmatpush1.bf16.msra.mxu0 0
      %459 = vmatprep.subr.bf16.mxu0 0
      %460 = vmatpush1.bf16.msra.mxu0 0
      %461 = vmatprep.subr.bf16.mxu0 0
      %462 = vmatpush1.bf16.msra.mxu0 0
      %463 = vmatprep.subr.bf16.mxu0 0
      %464 = vmatpush1.bf16.msra.mxu0 0
      %465 = vmatprep.subr.bf16.mxu0 0
      %466 = vmatpush1.bf16.msra.mxu0 0
      %467 = vmatprep.subr.bf16.mxu0 0
      %468 = vmatpush1.bf16.msra.mxu0 %v451
      %469 = vmatprep.subr.bf16.mxu0 0
      %470 = vmatpush2.bf16.msra.mxu0 0
      %471 = vmatprep.subr.bf16.mxu0 0
      %472 = vmatpush2.bf16.msra.mxu0 0
      %473 = vmatprep.subr.bf16.mxu0 0
      %474 = vmatpush2.bf16.msra.mxu0 0
      %475 = vmatprep.subr.bf16.mxu0 0
      %476 = vmatpush2.bf16.msra.mxu0 0
      %477 = vmatprep.subr.bf16.mxu0 0
      %478 = vmatpush2.bf16.msra.mxu0 0
      %479 = vmatprep.subr.bf16.mxu0 0
      %480 = vmatpush2.bf16.msra.mxu0 0
      %481 = vmatprep.subr.bf16.mxu0 0
      %482 = vmatpush2.bf16.msra.mxu0 0
      %483 = vmatprep.subr.bf16.mxu0 0
      %484 = vmatpush2.bf16.msra.mxu0 0
      %485 = vmatprep.mubr.bf16.mxu0 0
      %486 = vmatmul.mubr.bf16.gmra.mxu0 %v402
      %v487 = vpop.f32.mrf.mxu0
      %v488 = vadd.f32 %v318, %v487
      %v489 = vpop.f32.mrf.mxu0
      %v490 = vpop.f32.mrf.mxu0
      %v491 = vadd.f32 %v318, %v490
      %v492 = vpop.f32.mrf.mxu0
      %493 = vmatprep.mubr.bf16.mxu0 0
      %494 = vmatmul.mubr.bf16.gmra.mxu0 %v405
      %v495 = vpop.f32.mrf.mxu0
      %v496 = vadd.f32 %v318, %v495
      %v497 = vpop.f32.mrf.mxu0
      %v498 = vpop.f32.mrf.mxu0
      %v499 = vadd.f32 %v318, %v498
      %v500 = vpop.f32.mrf.mxu0
      %501 = vmatprep.mubr.bf16.mxu0 0
      %502 = vmatmul.mubr.bf16.gmra.mxu0 %v408
      %v503 = vpop.f32.mrf.mxu0
      %v504 = vadd.f32 %v318, %v503
      %v505 = vpop.f32.mrf.mxu0
      %v506 = vpop.f32.mrf.mxu0
      %v507 = vadd.f32 %v318, %v506
      %v508 = vpop.f32.mrf.mxu0
      %509 = vmatprep.mubr.bf16.mxu0 0
      %510 = vmatmul.mubr.bf16.gmra.mxu0 %v411
      %v511 = vpop.f32.mrf.mxu0
      %v512 = vadd.f32 %v318, %v511
      %v513 = vpop.f32.mrf.mxu0
      %v514 = vpop.f32.mrf.mxu0
      %v515 = vadd.f32 %v318, %v514
      %v516 = vpop.f32.mrf.mxu0
      %517 = vmatprep.mubr.bf16.mxu0 0
      %518 = vmatmul.mubr.bf16.gmra.mxu0 %v414
      %v519 = vpop.f32.mrf.mxu0
      %v520 = vadd.f32 %v318, %v519
      %v521 = vpop.f32.mrf.mxu0
      %v522 = vpop.f32.mrf.mxu0
      %v523 = vadd.f32 %v318, %v522
      %v524 = vpop.f32.mrf.mxu0
      %525 = vmatprep.mubr.bf16.mxu0 0
      %526 = vmatmul.mubr.bf16.gmra.mxu0 %v417
      %v527 = vpop.f32.mrf.mxu0
      %v528 = vadd.f32 %v318, %v527
      %v529 = vpop.f32.mrf.mxu0
      %v530 = vpop.f32.mrf.mxu0
      %v531 = vadd.f32 %v318, %v530
      %v532 = vpop.f32.mrf.mxu0
      %533 = vmatprep.mubr.bf16.mxu0 0
      %534 = vmatmul.mubr.bf16.gmra.mxu0 %v420
      %v535 = vpop.f32.mrf.mxu0
      %v536 = vadd.f32 %v318, %v535
      %v537 = vpop.f32.mrf.mxu0
      %v538 = vpop.f32.mrf.mxu0
      %v539 = vadd.f32 %v318, %v538
      %v540 = vpop.f32.mrf.mxu0
      %541 = vmatprep.mubr.bf16.mxu0 0
      %542 = vmatmul.mubr.bf16.gmra.mxu0 %v423
      %v543 = vpop.f32.mrf.mxu0
      %v544 = vadd.f32 %v318, %v543
      %v545 = vpop.f32.mrf.mxu0
      %v546 = vpop.f32.mrf.mxu0
      %v547 = vadd.f32 %v318, %v546
      %v548 = vpop.f32.mrf.mxu0
      %549 = vmatprep.mubr.bf16.mxu0 0
      %550 = vmatmul.mubr.bf16.gmra.mxu0 %v426
      %v551 = vpop.f32.mrf.mxu0
      %v552 = vadd.f32 %v318, %v551
      %v553 = vpop.f32.mrf.mxu0
      %v554 = vpop.f32.mrf.mxu0
      %v555 = vadd.f32 %v318, %v554
      %v556 = vpop.f32.mrf.mxu0
      %557 = vmatprep.mubr.bf16.mxu0 0
      %558 = vmatmul.mubr.bf16.gmra.mxu0 %v429
      %v559 = vpop.f32.mrf.mxu0
      %v560 = vadd.f32 %v318, %v559
      %v561 = vpop.f32.mrf.mxu0
      %v562 = vpop.f32.mrf.mxu0
      %v563 = vadd.f32 %v318, %v562
      %v564 = vpop.f32.mrf.mxu0
      %565 = vmatprep.mubr.bf16.mxu0 0
      %566 = vmatmul.mubr.bf16.gmra.mxu0 %v432
      %v567 = vpop.f32.mrf.mxu0
      %v568 = vadd.f32 %v318, %v567
      %v569 = vpop.f32.mrf.mxu0
      %v570 = vpop.f32.mrf.mxu0
      %v571 = vadd.f32 %v318, %v570
      %v572 = vpop.f32.mrf.mxu0
      %573 = vmatprep.mubr.bf16.mxu0 0
      %574 = vmatmul.mubr.bf16.gmra.mxu0 %v435
      %v575 = vpop.f32.mrf.mxu0
      %v576 = vadd.f32 %v318, %v575
      %v577 = vpop.f32.mrf.mxu0
      %v578 = vpop.f32.mrf.mxu0
      %v579 = vadd.f32 %v318, %v578
      %v580 = vpop.f32.mrf.mxu0
      %581 = vmatprep.mubr.bf16.mxu0 0
      %582 = vmatmul.mubr.bf16.gmra.mxu0 %v438
      %v583 = vpop.f32.mrf.mxu0
      %v584 = vadd.f32 %v318, %v583
      %v585 = vpop.f32.mrf.mxu0
      %v586 = vpop.f32.mrf.mxu0
      %v587 = vadd.f32 %v318, %v586
      %v588 = vpop.f32.mrf.mxu0
      %589 = vmatprep.mubr.bf16.mxu0 0
      %590 = vmatmul.mubr.bf16.gmra.mxu0 %v441
      %v591 = vpop.f32.mrf.mxu0
      %v592 = vadd.f32 %v318, %v591
      %v593 = vpop.f32.mrf.mxu0
      %v594 = vpop.f32.mrf.mxu0
      %v595 = vadd.f32 %v318, %v594
      %v596 = vpop.f32.mrf.mxu0
      %597 = vmatprep.mubr.bf16.mxu0 0
      %598 = vmatmul.mubr.bf16.gmra.mxu0 %v444
      %v599 = vpop.f32.mrf.mxu0
      %v600 = vadd.f32 %v318, %v599
      %v601 = vpop.f32.mrf.mxu0
      %v602 = vpop.f32.mrf.mxu0
      %v603 = vadd.f32 %v318, %v602
      %v604 = vpop.f32.mrf.mxu0
      %605 = vmatprep.mubr.bf16.mxu0 0
      %606 = vmatmul.mubr.bf16.gmra.mxu0 %v447
      %v607 = vpop.f32.mrf.mxu0
      %v608 = vadd.f32 %v318, %v607
      %v609 = vpop.f32.mrf.mxu0
      %v610 = vpop.f32.mrf.mxu0
      %v611 = vadd.f32 %v318, %v610
      %v612 = vpop.f32.mrf.mxu0
      %613 = vdwg.mxu0
      %v614 = vmax.f32 %v488, 0.0
      %v615 = vmax.f32 %v491, 0.0
      %v616 = vmax.f32 %v496, 0.0
      %v617 = vmax.f32 %v499, 0.0
      %v618 = vmax.f32 %v504, 0.0
      %v619 = vmax.f32 %v507, 0.0
      %v620 = vmax.f32 %v512, 0.0
      %v621 = vmax.f32 %v515, 0.0
      %v622 = vmax.f32 %v520, 0.0
      %v623 = vmax.f32 %v523, 0.0
      %v624 = vmax.f32 %v528, 0.0
      %v625 = vmax.f32 %v531, 0.0
      %v626 = vmax.f32 %v536, 0.0
      %v627 = vmax.f32 %v539, 0.0
      %v628 = vmax.f32 %v544, 0.0
      %v629 = vmax.f32 %v547, 0.0
      %v630 = vmax.f32 %v552, 0.0
      %v631 = vmax.f32 %v555, 0.0
      %v632 = vmax.f32 %v560, 0.0
      %v633 = vmax.f32 %v563, 0.0
      %v634 = vmax.f32 %v568, 0.0
      %v635 = vmax.f32 %v571, 0.0
      %v636 = vmax.f32 %v576, 0.0
      %v637 = vmax.f32 %v579, 0.0
      %v638 = vmax.f32 %v584, 0.0
      %v639 = vmax.f32 %v587, 0.0
      %v640 = vmax.f32 %v592, 0.0
      %v641 = vmax.f32 %v595, 0.0
      %v642 = vmax.f32 %v600, 0.0
      %v643 = vmax.f32 %v603, 0.0
      %v644 = vmax.f32 %v608, 0.0
      %v645 = vmax.f32 %v611, 0.0
      %v646 = vpack.c.bf16 %v615, %v614
      %v647 = vpack.c.bf16 %v617, %v616
      %v648 = vpack.c.bf16 %v619, %v618
      %v649 = vpack.c.bf16 %v621, %v620
      %v650 = vpack.c.bf16 %v623, %v622
      %v651 = vpack.c.bf16 %v625, %v624
      %v652 = vpack.c.bf16 %v627, %v626
      %v653 = vpack.c.bf16 %v629, %v628
      %v654 = vpack.c.bf16 %v631, %v630
      %v655 = vpack.c.bf16 %v633, %v632
      %v656 = vpack.c.bf16 %v635, %v634
      %v657 = vpack.c.bf16 %v637, %v636
      %v658 = vpack.c.bf16 %v639, %v638
      %v659 = vpack.c.bf16 %v641, %v640
      %v660 = vpack.c.bf16 %v643, %v642
      %v661 = vpack.c.bf16 %v645, %v644
      %s662 = scalar_lea.vmem [#allocation2], 280
      %vm663 = vcmask 60416
      %664 = vst.msk [vmem:[%s662] sm:$0xf] %vm663, 0
      %vm665 = vcmask 57344
      %vm666 = vsmask.f32 256
      %vm667 = vmand %vm665, %vm666
      %v668 = vld [vmem:[%s662 + $0x4] sm:$0x1]
      %v669 = vsel %vm667, 0, %v668
      %670 = vst [vmem:[%s662 + $0x4] sm:$0x1] %v669
      %s671 = scalar_lea.vmem [#allocation2], 216
      %v672 = vld [vmem:[%s671 + $0x4] sm:$0x1]
      %v673 = vsel %vm667, 0, %v672
      %674 = vst [vmem:[%s671 + $0x4] sm:$0x1] %v673
      %v675 = vld [vmem:[%s671 + $0xc] sm:$0x1]
      %v676 = vsel %vm667, 0, %v675
      %677 = vst [vmem:[%s671 + $0xc] sm:$0x1] %v676
      %v678 = vld [vmem:[%s671 + $0x14] sm:$0x1]
      %v679 = vsel %vm667, 0, %v678
      %680 = vst [vmem:[%s671 + $0x14] sm:$0x1] %v679
      %v681 = vld [vmem:[%s671 + $0x1c] sm:$0x1]
      %v682 = vsel %vm667, 0, %v681
      %683 = vst [vmem:[%s671 + $0x1c] sm:$0x1] %v682
      %v684 = vld [vmem:[%s671 + $0x24] sm:$0x1]
      %v685 = vsel %vm667, 0, %v684
      %686 = vst [vmem:[%s671 + $0x24] sm:$0x1] %v685
      %v687 = vld [vmem:[%s671 + $0x2c] sm:$0x1]
      %v688 = vsel %vm667, 0, %v687
      %689 = vst [vmem:[%s671 + $0x2c] sm:$0x1] %v688
      %v690 = vld [vmem:[%s671 + $0x34] sm:$0x1]
      %v691 = vsel %vm667, 0, %v690
      %692 = vst [vmem:[%s671 + $0x34] sm:$0x1] %v691
      %v693 = vld [vmem:[%s671 + $0x3c] sm:$0x1]
      %v694 = vsel %vm667, 0, %v693
      %695 = vst [vmem:[%s671 + $0x3c] sm:$0x1] %v694
      %v700 = vunpack.c.l.b16 %v646
      %v701 = vunpack.c.h.b16 %v646
      %v702 = vunpack.c.l.b16 %v647
      %v703 = vunpack.c.h.b16 %v647
      %v704 = vunpack.c.l.b16 %v648
      %v705 = vunpack.c.h.b16 %v648
      %v706 = vunpack.c.l.b16 %v649
      %v707 = vunpack.c.h.b16 %v649
      %v708 = vpack.c.b16 %v700, %v700
      %v709 = vpack.c.b16 %v701, %v701
      %v710 = vpack.c.b16 %v702, %v702
      %v711 = vpack.c.b16 %v703, %v703
      %v712 = vpack.c.b16 %v704, %v704
      %v713 = vpack.c.b16 %v705, %v705
      %v714 = vpack.c.b16 %v706, %v706
      %v715 = vpack.c.b16 %v707, %v707
      %724 = vst.msk [vmem:[%s671] sm:$0xf] %vm663, %v708
      %725 = vst.msk [vmem:[%s671 + $0x8] sm:$0xf] %vm663, %v709
      %726 = vst.msk [vmem:[%s671 + $0x10] sm:$0xf] %vm663, %v710
      %727 = vst.msk [vmem:[%s671 + $0x18] sm:$0xf] %vm663, %v711
      %728 = vst.msk [vmem:[%s671 + $0x20] sm:$0xf] %vm663, %v712
      %729 = vst.msk [vmem:[%s671 + $0x28] sm:$0xf] %vm663, %v713
      %730 = vst.msk [vmem:[%s671 + $0x30] sm:$0xf] %vm663, %v714
      %731 = vst.msk [vmem:[%s671 + $0x38] sm:$0xf] %vm663, %v715
      %s732 = scalar_lea.vmem [#allocation2], 208
      %733 = vst.msk [vmem:[%s732] sm:$0xf] %vm663, 0
      %v734 = vld [vmem:[%s732 + $0x4] sm:$0x1]
      %v735 = vsel %vm667, 0, %v734
      %736 = vst [vmem:[%s732 + $0x4] sm:$0x1] %v735
      %s737 = scalar_lea.vmem [#allocation2], 144
      %v738 = vld [vmem:[%s737] sm:$0x1]
      %v739 = vsel %vm667, 0, %v738
      %740 = vst [vmem:[%s737] sm:$0x1] %v739
      %v741 = vld [vmem:[%s737 + $0x8] sm:$0x1]
      %v742 = vsel %vm667, 0, %v741
      %743 = vst [vmem:[%s737 + $0x8] sm:$0x1] %v742
      %v744 = vld [vmem:[%s737 + $0x10] sm:$0x1]
      %v745 = vsel %vm667, 0, %v744
      %746 = vst [vmem:[%s737 + $0x10] sm:$0x1] %v745
      %v747 = vld [vmem:[%s737 + $0x18] sm:$0x1]
      %v748 = vsel %vm667, 0, %v747
      %749 = vst [vmem:[%s737 + $0x18] sm:$0x1] %v748
      %v750 = vld [vmem:[%s737 + $0x20] sm:$0x1]
      %v751 = vsel %vm667, 0, %v750
      %752 = vst [vmem:[%s737 + $0x20] sm:$0x1] %v751
      %v753 = vld [vmem:[%s737 + $0x28] sm:$0x1]
      %v754 = vsel %vm667, 0, %v753
      %755 = vst [vmem:[%s737 + $0x28] sm:$0x1] %v754
      %v756 = vld [vmem:[%s737 + $0x30] sm:$0x1]
      %v757 = vsel %vm667, 0, %v756
      %758 = vst [vmem:[%s737 + $0x30] sm:$0x1] %v757
      %v759 = vld [vmem:[%s737 + $0x38] sm:$0x1]
      %v760 = vsel %vm667, 0, %v759
      %761 = vst [vmem:[%s737 + $0x38] sm:$0x1] %v760
      %v766 = vunpack.c.l.b16 %v650
      %v767 = vunpack.c.h.b16 %v650
      %v768 = vunpack.c.l.b16 %v651
      %v769 = vunpack.c.h.b16 %v651
      %v770 = vunpack.c.l.b16 %v652
      %v771 = vunpack.c.h.b16 %v652
      %v772 = vunpack.c.l.b16 %v653
      %v773 = vunpack.c.h.b16 %v653
      %v774 = vpack.c.b16 %v766, %v766
      %v775 = vpack.c.b16 %v767, %v767
      %v776 = vpack.c.b16 %v768, %v768
      %v777 = vpack.c.b16 %v769, %v769
      %v778 = vpack.c.b16 %v770, %v770
      %v779 = vpack.c.b16 %v771, %v771
      %v780 = vpack.c.b16 %v772, %v772
      %v781 = vpack.c.b16 %v773, %v773
      %v783 = vshrl.u32 %v774, 16
      %v785 = vrot.slane %v783, 7
      %v786 = vshll.u32 %v774, 16
      %v788 = vor.u32 %v785, %v786
      %v789 = vrot.slane %v785, 4
      %v791 = vshrl.u32 %v775, 16
      %v793 = vrot.slane %v791, 7
      %v794 = vshll.u32 %v775, 16
      %v796 = vor.u32 %v793, %v794
      %v797 = vrot.slane %v793, 4
      %v799 = vshrl.u32 %v776, 16
      %v801 = vrot.slane %v799, 7
      %v802 = vshll.u32 %v776, 16
      %v804 = vor.u32 %v801, %v802
      %v805 = vrot.slane %v801, 4
      %v807 = vshrl.u32 %v777, 16
      %v809 = vrot.slane %v807, 7
      %v810 = vshll.u32 %v777, 16
      %v812 = vor.u32 %v809, %v810
      %v813 = vrot.slane %v809, 4
      %v815 = vshrl.u32 %v778, 16
      %v817 = vrot.slane %v815, 7
      %v818 = vshll.u32 %v778, 16
      %v820 = vor.u32 %v817, %v818
      %v821 = vrot.slane %v817, 4
      %v823 = vshrl.u32 %v779, 16
      %v825 = vrot.slane %v823, 7
      %v826 = vshll.u32 %v779, 16
      %v828 = vor.u32 %v825, %v826
      %v829 = vrot.slane %v825, 4
      %v831 = vshrl.u32 %v780, 16
      %v833 = vrot.slane %v831, 7
      %v834 = vshll.u32 %v780, 16
      %v836 = vor.u32 %v833, %v834
      %v837 = vrot.slane %v833, 4
      %v839 = vshrl.u32 %v781, 16
      %v841 = vrot.slane %v839, 7
      %v842 = vshll.u32 %v781, 16
      %v844 = vor.u32 %v841, %v842
      %v845 = vrot.slane %v841, 4
      %vm862 = vcmask 60416
      %vm863 = vsmask.f32 7938
      %vm864 = vmand %vm862, %vm863
      %v865 = vld [vmem:[%s737] sm:$0xf]
      %v866 = vsel %vm864, %v788, %v865
      %867 = vst [vmem:[%s737] sm:$0xf] %v866
      %v868 = vld [vmem:[%s737 + $0x4] sm:$0x1]
      %v869 = vsel %vm667, %v789, %v868
      %870 = vst [vmem:[%s737 + $0x4] sm:$0x1] %v869
      %v871 = vld [vmem:[%s737 + $0x8] sm:$0xf]
      %v872 = vsel %vm864, %v796, %v871
      %873 = vst [vmem:[%s737 + $0x8] sm:$0xf] %v872
      %v874 = vld [vmem:[%s737 + $0xc] sm:$0x1]
      %v875 = vsel %vm667, %v797, %v874
      %876 = vst [vmem:[%s737 + $0xc] sm:$0x1] %v875
      %v877 = vld [vmem:[%s737 + $0x10] sm:$0xf]
      %v878 = vsel %vm864, %v804, %v877
      %879 = vst [vmem:[%s737 + $0x10] sm:$0xf] %v878
      %v880 = vld [vmem:[%s737 + $0x14] sm:$0x1]
      %v881 = vsel %vm667, %v805, %v880
      %882 = vst [vmem:[%s737 + $0x14] sm:$0x1] %v881
      %v883 = vld [vmem:[%s737 + $0x18] sm:$0xf]
      %v884 = vsel %vm864, %v812, %v883
      %885 = vst [vmem:[%s737 + $0x18] sm:$0xf] %v884
      %v886 = vld [vmem:[%s737 + $0x1c] sm:$0x1]
      %v887 = vsel %vm667, %v813, %v886
      %888 = vst [vmem:[%s737 + $0x1c] sm:$0x1] %v887
      %v889 = vld [vmem:[%s737 + $0x20] sm:$0xf]
      %v890 = vsel %vm864, %v820, %v889
      %891 = vst [vmem:[%s737 + $0x20] sm:$0xf] %v890
      %v892 = vld [vmem:[%s737 + $0x24] sm:$0x1]
      %v893 = vsel %vm667, %v821, %v892
      %894 = vst [vmem:[%s737 + $0x24] sm:$0x1] %v893
      %v895 = vld [vmem:[%s737 + $0x28] sm:$0xf]
      %v896 = vsel %vm864, %v828, %v895
      %897 = vst [vmem:[%s737 + $0x28] sm:$0xf] %v896
      %v898 = vld [vmem:[%s737 + $0x2c] sm:$0x1]
      %v899 = vsel %vm667, %v829, %v898
      %900 = vst [vmem:[%s737 + $0x2c] sm:$0x1] %v899
      %v901 = vld [vmem:[%s737 + $0x30] sm:$0xf]
      %v902 = vsel %vm864, %v836, %v901
      %903 = vst [vmem:[%s737 + $0x30] sm:$0xf] %v902
      %v904 = vld [vmem:[%s737 + $0x34] sm:$0x1]
      %v905 = vsel %vm667, %v837, %v904
      %906 = vst [vmem:[%s737 + $0x34] sm:$0x1] %v905
      %v907 = vld [vmem:[%s737 + $0x38] sm:$0xf]
      %v908 = vsel %vm864, %v844, %v907
      %909 = vst [vmem:[%s737 + $0x38] sm:$0xf] %v908
      %v910 = vld [vmem:[%s737 + $0x3c] sm:$0x1]
      %v911 = vsel %vm667, %v845, %v910
      %912 = vst [vmem:[%s737 + $0x3c] sm:$0x1] %v911
      %s913 = scalar_lea.vmem [#allocation2], 72
      %914 = vst.msk [vmem:[%s913] sm:$0xf] %vm663, 0
      %v915 = vld [vmem:[%s913 + $0x4] sm:$0x1]
      %v916 = vsel %vm667, 0, %v915
      %917 = vst [vmem:[%s913 + $0x4] sm:$0x1] %v916
      %s918 = scalar_lea.vmem [#allocation2], 80
      %v919 = vld [vmem:[%s918 + $0x4] sm:$0x1]
      %v920 = vsel %vm667, 0, %v919
      %921 = vst [vmem:[%s918 + $0x4] sm:$0x1] %v920
      %v922 = vld [vmem:[%s918 + $0xc] sm:$0x1]
      %v923 = vsel %vm667, 0, %v922
      %924 = vst [vmem:[%s918 + $0xc] sm:$0x1] %v923
      %v925 = vld [vmem:[%s918 + $0x14] sm:$0x1]
      %v926 = vsel %vm667, 0, %v925
      %927 = vst [vmem:[%s918 + $0x14] sm:$0x1] %v926
      %v928 = vld [vmem:[%s918 + $0x1c] sm:$0x1]
      %v929 = vsel %vm667, 0, %v928
      %930 = vst [vmem:[%s918 + $0x1c] sm:$0x1] %v929
      %v931 = vld [vmem:[%s918 + $0x24] sm:$0x1]
      %v932 = vsel %vm667, 0, %v931
      %933 = vst [vmem:[%s918 + $0x24] sm:$0x1] %v932
      %v934 = vld [vmem:[%s918 + $0x2c] sm:$0x1]
      %v935 = vsel %vm667, 0, %v934
      %936 = vst [vmem:[%s918 + $0x2c] sm:$0x1] %v935
      %v937 = vld [vmem:[%s918 + $0x34] sm:$0x1]
      %v938 = vsel %vm667, 0, %v937
      %939 = vst [vmem:[%s918 + $0x34] sm:$0x1] %v938
      %v940 = vld [vmem:[%s918 + $0x3c] sm:$0x1]
      %v941 = vsel %vm667, 0, %v940
      %942 = vst [vmem:[%s918 + $0x3c] sm:$0x1] %v941
      %v947 = vunpack.c.l.b16 %v654
      %v948 = vunpack.c.h.b16 %v654
      %v949 = vunpack.c.l.b16 %v655
      %v950 = vunpack.c.h.b16 %v655
      %v951 = vunpack.c.l.b16 %v656
      %v952 = vunpack.c.h.b16 %v656
      %v953 = vunpack.c.l.b16 %v657
      %v954 = vunpack.c.h.b16 %v657
      %v955 = vpack.c.b16 %v947, %v947
      %v956 = vpack.c.b16 %v948, %v948
      %v957 = vpack.c.b16 %v949, %v949
      %v958 = vpack.c.b16 %v950, %v950
      %v959 = vpack.c.b16 %v951, %v951
      %v960 = vpack.c.b16 %v952, %v952
      %v961 = vpack.c.b16 %v953, %v953
      %v962 = vpack.c.b16 %v954, %v954
      %971 = vst.msk [vmem:[%s918] sm:$0xf] %vm663, %v955
      %972 = vst.msk [vmem:[%s918 + $0x8] sm:$0xf] %vm663, %v956
      %973 = vst.msk [vmem:[%s918 + $0x10] sm:$0xf] %vm663, %v957
      %974 = vst.msk [vmem:[%s918 + $0x18] sm:$0xf] %vm663, %v958
      %975 = vst.msk [vmem:[%s918 + $0x20] sm:$0xf] %vm663, %v959
      %976 = vst.msk [vmem:[%s918 + $0x28] sm:$0xf] %vm663, %v960
      %977 = vst.msk [vmem:[%s918 + $0x30] sm:$0xf] %vm663, %v961
      %978 = vst.msk [vmem:[%s918 + $0x38] sm:$0xf] %vm663, %v962
      %979 = vst.msk [vmem:[#allocation2] sm:$0xf] %vm663, 0
      %v980 = vld [vmem:[#allocation2 + $0x4] sm:$0x1]
      %v981 = vsel %vm667, 0, %v980
      %982 = vst [vmem:[#allocation2 + $0x4] sm:$0x1] %v981
      %s983 = scalar_lea.vmem [#allocation2], 8
      %v984 = vld [vmem:[%s983] sm:$0x1]
      %v985 = vsel %vm667, 0, %v984
      %986 = vst [vmem:[%s983] sm:$0x1] %v985
      %v987 = vld [vmem:[%s983 + $0x8] sm:$0x1]
      %v988 = vsel %vm667, 0, %v987
      %989 = vst [vmem:[%s983 + $0x8] sm:$0x1] %v988
      %v990 = vld [vmem:[%s983 + $0x10] sm:$0x1]
      %v991 = vsel %vm667, 0, %v990
      %992 = vst [vmem:[%s983 + $0x10] sm:$0x1] %v991
      %v993 = vld [vmem:[%s983 + $0x18] sm:$0x1]
      %v994 = vsel %vm667, 0, %v993
      %995 = vst [vmem:[%s983 + $0x18] sm:$0x1] %v994
      %v996 = vld [vmem:[%s983 + $0x20] sm:$0x1]
      %v997 = vsel %vm667, 0, %v996
      %998 = vst [vmem:[%s983 + $0x20] sm:$0x1] %v997
      %v999 = vld [vmem:[%s983 + $0x28] sm:$0x1]
      %v1000 = vsel %vm667, 0, %v999
      %1001 = vst [vmem:[%s983 + $0x28] sm:$0x1] %v1000
      %v1002 = vld [vmem:[%s983 + $0x30] sm:$0x1]
      %v1003 = vsel %vm667, 0, %v1002
      %1004 = vst [vmem:[%s983 + $0x30] sm:$0x1] %v1003
      %v1005 = vld [vmem:[%s983 + $0x38] sm:$0x1]
      %v1006 = vsel %vm667, 0, %v1005
      %1007 = vst [vmem:[%s983 + $0x38] sm:$0x1] %v1006
      %v1012 = vunpack.c.l.b16 %v658
      %v1013 = vunpack.c.h.b16 %v658
      %v1014 = vunpack.c.l.b16 %v659
      %v1015 = vunpack.c.h.b16 %v659
      %v1016 = vunpack.c.l.b16 %v660
      %v1017 = vunpack.c.h.b16 %v660
      %v1018 = vunpack.c.l.b16 %v661
      %v1019 = vunpack.c.h.b16 %v661
      %v1020 = vpack.c.b16 %v1012, %v1012
      %v1021 = vpack.c.b16 %v1013, %v1013
      %v1022 = vpack.c.b16 %v1014, %v1014
      %v1023 = vpack.c.b16 %v1015, %v1015
      %v1024 = vpack.c.b16 %v1016, %v1016
      %v1025 = vpack.c.b16 %v1017, %v1017
      %v1026 = vpack.c.b16 %v1018, %v1018
      %v1027 = vpack.c.b16 %v1019, %v1019
      %v1029 = vshrl.u32 %v1020, 16
      %v1031 = vrot.slane %v1029, 7
      %v1032 = vshll.u32 %v1020, 16
      %v1034 = vor.u32 %v1031, %v1032
      %v1035 = vrot.slane %v1031, 4
      %v1037 = vshrl.u32 %v1021, 16
      %v1039 = vrot.slane %v1037, 7
      %v1040 = vshll.u32 %v1021, 16
      %v1042 = vor.u32 %v1039, %v1040
      %v1043 = vrot.slane %v1039, 4
      %v1045 = vshrl.u32 %v1022, 16
      %v1047 = vrot.slane %v1045, 7
      %v1048 = vshll.u32 %v1022, 16
      %v1050 = vor.u32 %v1047, %v1048
      %v1051 = vrot.slane %v1047, 4
      %v1053 = vshrl.u32 %v1023, 16
      %v1055 = vrot.slane %v1053, 7
      %v1056 = vshll.u32 %v1023, 16
      %v1058 = vor.u32 %v1055, %v1056
      %v1059 = vrot.slane %v1055, 4
      %v1061 = vshrl.u32 %v1024, 16
      %v1063 = vrot.slane %v1061, 7
      %v1064 = vshll.u32 %v1024, 16
      %v1066 = vor.u32 %v1063, %v1064
      %v1067 = vrot.slane %v1063, 4
      %v1069 = vshrl.u32 %v1025, 16
      %v1071 = vrot.slane %v1069, 7
      %v1072 = vshll.u32 %v1025, 16
      %v1074 = vor.u32 %v1071, %v1072
      %v1075 = vrot.slane %v1071, 4
      %v1077 = vshrl.u32 %v1026, 16
      %v1079 = vrot.slane %v1077, 7
      %v1080 = vshll.u32 %v1026, 16
      %v1082 = vor.u32 %v1079, %v1080
      %v1083 = vrot.slane %v1079, 4
      %v1085 = vshrl.u32 %v1027, 16
      %v1087 = vrot.slane %v1085, 7
      %v1088 = vshll.u32 %v1027, 16
      %v1090 = vor.u32 %v1087, %v1088
      %v1091 = vrot.slane %v1087, 4
      %v1108 = vld [vmem:[%s983] sm:$0xf]
      %v1109 = vsel %vm864, %v1034, %v1108
      %1110 = vst [vmem:[%s983] sm:$0xf] %v1109
      %v1111 = vld [vmem:[%s983 + $0x4] sm:$0x1]
      %v1112 = vsel %vm667, %v1035, %v1111
      %1113 = vst [vmem:[%s983 + $0x4] sm:$0x1] %v1112
      %v1114 = vld [vmem:[%s983 + $0x8] sm:$0xf]
      %v1115 = vsel %vm864, %v1042, %v1114
      %1116 = vst [vmem:[%s983 + $0x8] sm:$0xf] %v1115
      %v1117 = vld [vmem:[%s983 + $0xc] sm:$0x1]
      %v1118 = vsel %vm667, %v1043, %v1117
      %1119 = vst [vmem:[%s983 + $0xc] sm:$0x1] %v1118
      %v1120 = vld [vmem:[%s983 + $0x10] sm:$0xf]
      %v1121 = vsel %vm864, %v1050, %v1120
      %1122 = vst [vmem:[%s983 + $0x10] sm:$0xf] %v1121
      %v1123 = vld [vmem:[%s983 + $0x14] sm:$0x1]
      %v1124 = vsel %vm667, %v1051, %v1123
      %1125 = vst [vmem:[%s983 + $0x14] sm:$0x1] %v1124
      %v1126 = vld [vmem:[%s983 + $0x18] sm:$0xf]
      %v1127 = vsel %vm864, %v1058, %v1126
      %1128 = vst [vmem:[%s983 + $0x18] sm:$0xf] %v1127
      %v1129 = vld [vmem:[%s983 + $0x1c] sm:$0x1]
      %v1130 = vsel %vm667, %v1059, %v1129
      %1131 = vst [vmem:[%s983 + $0x1c] sm:$0x1] %v1130
      %v1132 = vld [vmem:[%s983 + $0x20] sm:$0xf]
      %v1133 = vsel %vm864, %v1066, %v1132
      %1134 = vst [vmem:[%s983 + $0x20] sm:$0xf] %v1133
      %v1135 = vld [vmem:[%s983 + $0x24] sm:$0x1]
      %v1136 = vsel %vm667, %v1067, %v1135
      %1137 = vst [vmem:[%s983 + $0x24] sm:$0x1] %v1136
      %v1138 = vld [vmem:[%s983 + $0x28] sm:$0xf]
      %v1139 = vsel %vm864, %v1074, %v1138
      %1140 = vst [vmem:[%s983 + $0x28] sm:$0xf] %v1139
      %v1141 = vld [vmem:[%s983 + $0x2c] sm:$0x1]
      %v1142 = vsel %vm667, %v1075, %v1141
      %1143 = vst [vmem:[%s983 + $0x2c] sm:$0x1] %v1142
      %v1144 = vld [vmem:[%s983 + $0x30] sm:$0xf]
      %v1145 = vsel %vm864, %v1082, %v1144
      %1146 = vst [vmem:[%s983 + $0x30] sm:$0xf] %v1145
      %v1147 = vld [vmem:[%s983 + $0x34] sm:$0x1]
      %v1148 = vsel %vm667, %v1083, %v1147
      %1149 = vst [vmem:[%s983 + $0x34] sm:$0x1] %v1148
      %v1150 = vld [vmem:[%s983 + $0x38] sm:$0xf]
      %v1151 = vsel %vm864, %v1090, %v1150
      %1152 = vst [vmem:[%s983 + $0x38] sm:$0xf] %v1151
      %v1153 = vld [vmem:[%s983 + $0x3c] sm:$0x1]
      %v1154 = vsel %vm667, %v1091, %v1153
      %1155 = vst [vmem:[%s983 + $0x3c] sm:$0x1] %v1154
      %v1156 = vld [vmem:[#allocation2] sm:$0xf]
      %v1157 = vld [vmem:[#allocation2 + $0x8] sm:$0xf]
      %v1158 = vld [vmem:[#allocation2 + $0x10] sm:$0xf]
      %v1159 = vld [vmem:[#allocation2 + $0x18] sm:$0xf]
      %v1160 = vld [vmem:[#allocation2 + $0x20] sm:$0xf]
      %v1161 = vld [vmem:[#allocation2 + $0x28] sm:$0xf]
      %v1162 = vld [vmem:[#allocation2 + $0x30] sm:$0xf]
      %v1163 = vld [vmem:[#allocation2 + $0x38] sm:$0xf]
      %v1164 = vld [vmem:[%s3] sm:$0xf]
      %v1165 = vld [vmem:[%s913] sm:$0xf]
      %v1166 = vld [vmem:[%s913 + $0x8] sm:$0xf]
      %v1167 = vld [vmem:[%s913 + $0x10] sm:$0xf]
      %v1168 = vld [vmem:[%s913 + $0x18] sm:$0xf]
      %v1169 = vld [vmem:[%s913 + $0x20] sm:$0xf]
      %v1170 = vld [vmem:[%s913 + $0x28] sm:$0xf]
      %v1171 = vld [vmem:[%s913 + $0x30] sm:$0xf]
      %v1172 = vld [vmem:[%s913 + $0x38] sm:$0xf]
      %s1173 = scalar_lea.vmem %s3, 4
      %v1174 = vld [vmem:[%s1173] sm:$0xf]
      %v1183 = vunpack.c.l.b16 %v1165
      %v1184 = vunpack.c.l.b16 %v1166
      %v1185 = vunpack.c.l.b16 %v1167
      %v1186 = vunpack.c.l.b16 %v1168
      %v1187 = vunpack.c.l.b16 %v1169
      %v1188 = vunpack.c.l.b16 %v1170
      %v1189 = vunpack.c.l.b16 %v1171
      %v1190 = vunpack.c.l.b16 %v1172
      %v1191 = vpack.c.b16 %v1184, %v1183
      %v1192 = vpack.c.b16 %v1186, %v1185
      %v1193 = vpack.c.b16 %v1188, %v1187
      %v1194 = vpack.c.b16 %v1190, %v1189
      %vm1195 = vcmask 64512
      %v1197 = vsel %vm1195, %v1191, 0
      %v1200 = vsel %vm1195, %v1192, 0
      %v1203 = vsel %vm1195, %v1193, 0
      %v1206 = vsel %vm1195, %v1194, 0
      %vm1208 = vcmask 1043456
      %v1210 = vsel %vm1208, %v1174, 0
      %1212 = vmatprep.subr.bf16.mxu0 0
      %1213 = vmatpush1.bf16.msra.mxu0 0
      %1214 = vmatprep.subr.bf16.mxu0 0
      %1215 = vmatpush1.bf16.msra.mxu0 0
      %1216 = vmatprep.subr.bf16.mxu0 0
      %1217 = vmatpush1.bf16.msra.mxu0 0
      %1218 = vmatprep.subr.bf16.mxu0 0
      %1219 = vmatpush1.bf16.msra.mxu0 0
      %1220 = vmatprep.subr.bf16.mxu0 0
      %1221 = vmatpush1.bf16.msra.mxu0 0
      %1222 = vmatprep.subr.bf16.mxu0 0
      %1223 = vmatpush1.bf16.msra.mxu0 0
      %1224 = vmatprep.subr.bf16.mxu0 0
      %1225 = vmatpush1.bf16.msra.mxu0 0
      %1226 = vmatprep.subr.bf16.mxu0 0
      %1227 = vmatpush1.bf16.msra.mxu0 %v1210
      %1228 = vmatprep.subr.bf16.mxu0 0
      %1229 = vmatpush2.bf16.msra.mxu0 0
      %1230 = vmatprep.subr.bf16.mxu0 0
      %1231 = vmatpush2.bf16.msra.mxu0 0
      %1232 = vmatprep.subr.bf16.mxu0 0
      %1233 = vmatpush2.bf16.msra.mxu0 0
      %1234 = vmatprep.subr.bf16.mxu0 0
      %1235 = vmatpush2.bf16.msra.mxu0 0
      %1236 = vmatprep.subr.bf16.mxu0 0
      %1237 = vmatpush2.bf16.msra.mxu0 0
      %1238 = vmatprep.subr.bf16.mxu0 0
      %1239 = vmatpush2.bf16.msra.mxu0 0
      %1240 = vmatprep.subr.bf16.mxu0 0
      %1241 = vmatpush2.bf16.msra.mxu0 0
      %1242 = vmatprep.subr.bf16.mxu0 0
      %1243 = vmatpush2.bf16.msra.mxu0 0
      %1244 = vmatprep.mubr.bf16.mxu0 0
      %1245 = vmatmul.mubr.bf16.gmra.mxu0 %v1197
      %v1246 = vpop.f32.mrf.mxu0
      %v1247 = vadd.f32 0.0, %v1246
      %v1248 = vpop.f32.mrf.mxu0
      %v1249 = vpop.f32.mrf.mxu0
      %v1250 = vadd.f32 0.0, %v1249
      %v1251 = vpop.f32.mrf.mxu0
      %1252 = vmatprep.mubr.bf16.mxu0 0
      %1253 = vmatmul.mubr.bf16.gmra.mxu0 %v1200
      %v1254 = vpop.f32.mrf.mxu0
      %v1255 = vadd.f32 0.0, %v1254
      %v1256 = vpop.f32.mrf.mxu0
      %v1257 = vpop.f32.mrf.mxu0
      %v1258 = vadd.f32 0.0, %v1257
      %v1259 = vpop.f32.mrf.mxu0
      %1260 = vmatprep.mubr.bf16.mxu0 0
      %1261 = vmatmul.mubr.bf16.gmra.mxu0 %v1203
      %v1262 = vpop.f32.mrf.mxu0
      %v1263 = vadd.f32 0.0, %v1262
      %v1264 = vpop.f32.mrf.mxu0
      %v1265 = vpop.f32.mrf.mxu0
      %v1266 = vadd.f32 0.0, %v1265
      %v1267 = vpop.f32.mrf.mxu0
      %1268 = vmatprep.mubr.bf16.mxu0 0
      %1269 = vmatmul.mubr.bf16.gmra.mxu0 %v1206
      %v1270 = vpop.f32.mrf.mxu0
      %v1271 = vadd.f32 0.0, %v1270
      %v1272 = vpop.f32.mrf.mxu0
      %v1273 = vpop.f32.mrf.mxu0
      %v1274 = vadd.f32 0.0, %v1273
      %v1275 = vpop.f32.mrf.mxu0
      %1276 = vdwg.mxu0
      %v1285 = vunpack.c.l.b16 %v1156
      %v1286 = vunpack.c.l.b16 %v1157
      %v1287 = vunpack.c.l.b16 %v1158
      %v1288 = vunpack.c.l.b16 %v1159
      %v1289 = vunpack.c.l.b16 %v1160
      %v1290 = vunpack.c.l.b16 %v1161
      %v1291 = vunpack.c.l.b16 %v1162
      %v1292 = vunpack.c.l.b16 %v1163
      %v1293 = vpack.c.b16 %v1286, %v1285
      %v1294 = vpack.c.b16 %v1288, %v1287
      %v1295 = vpack.c.b16 %v1290, %v1289
      %v1296 = vpack.c.b16 %v1292, %v1291
      %v1298 = vsel %vm1195, %v1293, 0
      %v1301 = vsel %vm1195, %v1294, 0
      %v1304 = vsel %vm1195, %v1295, 0
      %v1307 = vsel %vm1195, %v1296, 0
      %v1310 = vsel %vm1208, %v1164, 0
      %1312 = vmatprep.subr.bf16.mxu0 0
      %1313 = vmatpush1.bf16.msra.mxu0 0
      %1314 = vmatprep.subr.bf16.mxu0 0
      %1315 = vmatpush1.bf16.msra.mxu0 0
      %1316 = vmatprep.subr.bf16.mxu0 0
      %1317 = vmatpush1.bf16.msra.mxu0 0
      %1318 = vmatprep.subr.bf16.mxu0 0
      %1319 = vmatpush1.bf16.msra.mxu0 0
      %1320 = vmatprep.subr.bf16.mxu0 0
      %1321 = vmatpush1.bf16.msra.mxu0 0
      %1322 = vmatprep.subr.bf16.mxu0 0
      %1323 = vmatpush1.bf16.msra.mxu0 0
      %1324 = vmatprep.subr.bf16.mxu0 0
      %1325 = vmatpush1.bf16.msra.mxu0 0
      %1326 = vmatprep.subr.bf16.mxu0 0
      %1327 = vmatpush1.bf16.msra.mxu0 %v1310
      %1328 = vmatprep.subr.bf16.mxu0 0
      %1329 = vmatpush2.bf16.msra.mxu0 0
      %1330 = vmatprep.subr.bf16.mxu0 0
      %1331 = vmatpush2.bf16.msra.mxu0 0
      %1332 = vmatprep.subr.bf16.mxu0 0
      %1333 = vmatpush2.bf16.msra.mxu0 0
      %1334 = vmatprep.subr.bf16.mxu0 0
      %1335 = vmatpush2.bf16.msra.mxu0 0
      %1336 = vmatprep.subr.bf16.mxu0 0
      %1337 = vmatpush2.bf16.msra.mxu0 0
      %1338 = vmatprep.subr.bf16.mxu0 0
      %1339 = vmatpush2.bf16.msra.mxu0 0
      %1340 = vmatprep.subr.bf16.mxu0 0
      %1341 = vmatpush2.bf16.msra.mxu0 0
      %1342 = vmatprep.subr.bf16.mxu0 0
      %1343 = vmatpush2.bf16.msra.mxu0 0
      %1344 = vmatprep.mubr.bf16.mxu0 0
      %1345 = vmatmul.mubr.bf16.gmra.mxu0 %v1298
      %v1346 = vpop.f32.mrf.mxu0
      %v1347 = vadd.f32 %v1247, %v1346
      %v1348 = vpop.f32.mrf.mxu0
      %v1349 = vpop.f32.mrf.mxu0
      %v1350 = vadd.f32 %v1250, %v1349
      %v1351 = vpop.f32.mrf.mxu0
      %1352 = vmatprep.mubr.bf16.mxu0 0
      %1353 = vmatmul.mubr.bf16.gmra.mxu0 %v1301
      %v1354 = vpop.f32.mrf.mxu0
      %v1355 = vadd.f32 %v1255, %v1354
      %v1356 = vpop.f32.mrf.mxu0
      %v1357 = vpop.f32.mrf.mxu0
      %v1358 = vadd.f32 %v1258, %v1357
      %v1359 = vpop.f32.mrf.mxu0
      %1360 = vmatprep.mubr.bf16.mxu0 0
      %1361 = vmatmul.mubr.bf16.gmra.mxu0 %v1304
      %v1362 = vpop.f32.mrf.mxu0
      %v1363 = vadd.f32 %v1263, %v1362
      %v1364 = vpop.f32.mrf.mxu0
      %v1365 = vpop.f32.mrf.mxu0
      %v1366 = vadd.f32 %v1266, %v1365
      %v1367 = vpop.f32.mrf.mxu0
      %1368 = vmatprep.mubr.bf16.mxu0 0
      %1369 = vmatmul.mubr.bf16.gmra.mxu0 %v1307
      %v1370 = vpop.f32.mrf.mxu0
      %v1371 = vadd.f32 %v1271, %v1370
      %v1372 = vpop.f32.mrf.mxu0
      %v1373 = vpop.f32.mrf.mxu0
      %v1374 = vadd.f32 %v1274, %v1373
      %v1375 = vpop.f32.mrf.mxu0
      %1376 = vdwg.mxu0
      %v1377 = vld [vmem:[#allocation2] sm:$0xf]
      %v1378 = vld [vmem:[#allocation2 + $0x4] sm:$0x1]
      %v1379 = vld [vmem:[#allocation2 + $0x8] sm:$0xf]
      %v1380 = vld [vmem:[#allocation2 + $0xc] sm:$0x1]
      %v1381 = vld [vmem:[#allocation2 + $0x10] sm:$0xf]
      %v1382 = vld [vmem:[#allocation2 + $0x14] sm:$0x1]
      %v1383 = vld [vmem:[#allocation2 + $0x18] sm:$0xf]
      %v1384 = vld [vmem:[#allocation2 + $0x1c] sm:$0x1]
      %v1385 = vld [vmem:[#allocation2 + $0x20] sm:$0xf]
      %v1386 = vld [vmem:[#allocation2 + $0x24] sm:$0x1]
      %v1387 = vld [vmem:[#allocation2 + $0x28] sm:$0xf]
      %v1388 = vld [vmem:[#allocation2 + $0x2c] sm:$0x1]
      %v1389 = vld [vmem:[#allocation2 + $0x30] sm:$0xf]
      %v1390 = vld [vmem:[#allocation2 + $0x34] sm:$0x1]
      %v1391 = vld [vmem:[#allocation2 + $0x38] sm:$0xf]
      %v1392 = vld [vmem:[#allocation2 + $0x3c] sm:$0x1]
      %vm1393 = vsmask.f32 3328
      %vm1394 = vsmask.f32 7440
      %vm1395 = vmor %vm1393, %vm1394
      %v1397 = vshrl.u32 %v1377, 16
      %v1399 = vrot.slane %v1397, 4
      %v1400 = vshll.u32 %v1377, 16
      %v1402 = vrot.slane %v1400, 5
      %v1403 = vor.u32 %v1399, %v1402
      %v1404 = vrot.slane %v1403, 4
      %v1406 = vshll.u32 %v1378, 16
      %v1408 = vrot.slane %v1406, 5
      %v1409 = vsel %vm1395, %v1404, %v1408
      %v1411 = vshrl.u32 %v1379, 16
      %v1413 = vrot.slane %v1411, 4
      %v1414 = vshll.u32 %v1379, 16
      %v1416 = vrot.slane %v1414, 5
      %v1417 = vor.u32 %v1413, %v1416
      %v1418 = vrot.slane %v1417, 4
      %v1420 = vshll.u32 %v1380, 16
      %v1422 = vrot.slane %v1420, 5
      %v1423 = vsel %vm1395, %v1418, %v1422
      %v1425 = vshrl.u32 %v1381, 16
      %v1427 = vrot.slane %v1425, 4
      %v1428 = vshll.u32 %v1381, 16
      %v1430 = vrot.slane %v1428, 5
      %v1431 = vor.u32 %v1427, %v1430
      %v1432 = vrot.slane %v1431, 4
      %v1434 = vshll.u32 %v1382, 16
      %v1436 = vrot.slane %v1434, 5
      %v1437 = vsel %vm1395, %v1432, %v1436
      %v1439 = vshrl.u32 %v1383, 16
      %v1441 = vrot.slane %v1439, 4
      %v1442 = vshll.u32 %v1383, 16
      %v1444 = vrot.slane %v1442, 5
      %v1445 = vor.u32 %v1441, %v1444
      %v1446 = vrot.slane %v1445, 4
      %v1448 = vshll.u32 %v1384, 16
      %v1450 = vrot.slane %v1448, 5
      %v1451 = vsel %vm1395, %v1446, %v1450
      %v1453 = vshrl.u32 %v1385, 16
      %v1455 = vrot.slane %v1453, 4
      %v1456 = vshll.u32 %v1385, 16
      %v1458 = vrot.slane %v1456, 5
      %v1459 = vor.u32 %v1455, %v1458
      %v1460 = vrot.slane %v1459, 4
      %v1462 = vshll.u32 %v1386, 16
      %v1464 = vrot.slane %v1462, 5
      %v1465 = vsel %vm1395, %v1460, %v1464
      %v1467 = vshrl.u32 %v1387, 16
      %v1469 = vrot.slane %v1467, 4
      %v1470 = vshll.u32 %v1387, 16
      %v1472 = vrot.slane %v1470, 5
      %v1473 = vor.u32 %v1469, %v1472
      %v1474 = vrot.slane %v1473, 4
      %v1476 = vshll.u32 %v1388, 16
      %v1478 = vrot.slane %v1476, 5
      %v1479 = vsel %vm1395, %v1474, %v1478
      %v1481 = vshrl.u32 %v1389, 16
      %v1483 = vrot.slane %v1481, 4
      %v1484 = vshll.u32 %v1389, 16
      %v1486 = vrot.slane %v1484, 5
      %v1487 = vor.u32 %v1483, %v1486
      %v1488 = vrot.slane %v1487, 4
      %v1490 = vshll.u32 %v1390, 16
      %v1492 = vrot.slane %v1490, 5
      %v1493 = vsel %vm1395, %v1488, %v1492
      %v1495 = vshrl.u32 %v1391, 16
      %v1497 = vrot.slane %v1495, 4
      %v1498 = vshll.u32 %v1391, 16
      %v1500 = vrot.slane %v1498, 5
      %v1501 = vor.u32 %v1497, %v1500
      %v1502 = vrot.slane %v1501, 4
      %v1504 = vshll.u32 %v1392, 16
      %v1506 = vrot.slane %v1504, 5
      %v1507 = vsel %vm1395, %v1502, %v1506
      %s1508 = scalar_lea.vmem %s3, 8
      %v1509 = vld [vmem:[%s1508] sm:$0xf]
      %v1510 = vunpack.c.l.b16 %v1409
      %v1511 = vunpack.c.l.b16 %v1423
      %v1512 = vunpack.c.l.b16 %v1437
      %v1513 = vunpack.c.l.b16 %v1451
      %v1514 = vunpack.c.l.b16 %v1465
      %v1515 = vunpack.c.l.b16 %v1479
      %v1516 = vunpack.c.l.b16 %v1493
      %v1517 = vunpack.c.l.b16 %v1507
      %v1518 = vpack.c.b16 %v1511, %v1510
      %v1519 = vpack.c.b16 %v1513, %v1512
      %v1520 = vpack.c.b16 %v1515, %v1514
      %v1521 = vpack.c.b16 %v1517, %v1516
      %v1523 = vsel %vm1195, %v1518, 0
      %v1526 = vsel %vm1195, %v1519, 0
      %v1529 = vsel %vm1195, %v1520, 0
      %v1532 = vsel %vm1195, %v1521, 0
      %v1535 = vsel %vm1208, %v1509, 0
      %1537 = vmatprep.subr.bf16.mxu0 0
      %1538 = vmatpush1.bf16.msra.mxu0 0
      %1539 = vmatprep.subr.bf16.mxu0 0
      %1540 = vmatpush1.bf16.msra.mxu0 0
      %1541 = vmatprep.subr.bf16.mxu0 0
      %1542 = vmatpush1.bf16.msra.mxu0 0
      %1543 = vmatprep.subr.bf16.mxu0 0
      %1544 = vmatpush1.bf16.msra.mxu0 0
      %1545 = vmatprep.subr.bf16.mxu0 0
      %1546 = vmatpush1.bf16.msra.mxu0 0
      %1547 = vmatprep.subr.bf16.mxu0 0
      %1548 = vmatpush1.bf16.msra.mxu0 0
      %1549 = vmatprep.subr.bf16.mxu0 0
      %1550 = vmatpush1.bf16.msra.mxu0 0
      %1551 = vmatprep.subr.bf16.mxu0 0
      %1552 = vmatpush1.bf16.msra.mxu0 %v1535
      %1553 = vmatprep.subr.bf16.mxu0 0
      %1554 = vmatpush2.bf16.msra.mxu0 0
      %1555 = vmatprep.subr.bf16.mxu0 0
      %1556 = vmatpush2.bf16.msra.mxu0 0
      %1557 = vmatprep.subr.bf16.mxu0 0
      %1558 = vmatpush2.bf16.msra.mxu0 0
      %1559 = vmatprep.subr.bf16.mxu0 0
      %1560 = vmatpush2.bf16.msra.mxu0 0
      %1561 = vmatprep.subr.bf16.mxu0 0
      %1562 = vmatpush2.bf16.msra.mxu0 0
      %1563 = vmatprep.subr.bf16.mxu0 0
      %1564 = vmatpush2.bf16.msra.mxu0 0
      %1565 = vmatprep.subr.bf16.mxu0 0
      %1566 = vmatpush2.bf16.msra.mxu0 0
      %1567 = vmatprep.subr.bf16.mxu0 0
      %1568 = vmatpush2.bf16.msra.mxu0 0
      %1569 = vmatprep.mubr.bf16.mxu0 0
      %1570 = vmatmul.mubr.bf16.gmra.mxu0 %v1523
      %v1571 = vpop.f32.mrf.mxu0
      %v1572 = vadd.f32 0.0, %v1571
      %v1573 = vpop.f32.mrf.mxu0
      %v1574 = vpop.f32.mrf.mxu0
      %v1575 = vadd.f32 0.0, %v1574
      %v1576 = vpop.f32.mrf.mxu0
      %1577 = vmatprep.mubr.bf16.mxu0 0
      %1578 = vmatmul.mubr.bf16.gmra.mxu0 %v1526
      %v1579 = vpop.f32.mrf.mxu0
      %v1580 = vadd.f32 0.0, %v1579
      %v1581 = vpop.f32.mrf.mxu0
      %v1582 = vpop.f32.mrf.mxu0
      %v1583 = vadd.f32 0.0, %v1582
      %v1584 = vpop.f32.mrf.mxu0
      %1585 = vmatprep.mubr.bf16.mxu0 0
      %1586 = vmatmul.mubr.bf16.gmra.mxu0 %v1529
      %v1587 = vpop.f32.mrf.mxu0
      %v1588 = vadd.f32 0.0, %v1587
      %v1589 = vpop.f32.mrf.mxu0
      %v1590 = vpop.f32.mrf.mxu0
      %v1591 = vadd.f32 0.0, %v1590
      %v1592 = vpop.f32.mrf.mxu0
      %1593 = vmatprep.mubr.bf16.mxu0 0
      %1594 = vmatmul.mubr.bf16.gmra.mxu0 %v1532
      %v1595 = vpop.f32.mrf.mxu0
      %v1596 = vadd.f32 0.0, %v1595
      %v1597 = vpop.f32.mrf.mxu0
      %v1598 = vpop.f32.mrf.mxu0
      %v1599 = vadd.f32 0.0, %v1598
      %v1600 = vpop.f32.mrf.mxu0
      %1601 = vdwg.mxu0
      %v1602 = vadd.f32 %v1347, %v1572
      %v1603 = vadd.f32 %v1350, %v1575
      %v1604 = vadd.f32 %v1355, %v1580
      %v1605 = vadd.f32 %v1358, %v1583
      %v1606 = vadd.f32 %v1363, %v1588
      %v1607 = vadd.f32 %v1366, %v1591
      %v1608 = vadd.f32 %v1371, %v1596
      %v1609 = vadd.f32 %v1374, %v1599
      %v1610 = vld [vmem:[%s737] sm:$0xf]
      %v1611 = vld [vmem:[%s737 + $0x8] sm:$0xf]
      %v1612 = vld [vmem:[%s737 + $0x10] sm:$0xf]
      %v1613 = vld [vmem:[%s737 + $0x18] sm:$0xf]
      %v1614 = vld [vmem:[%s737 + $0x20] sm:$0xf]
      %v1615 = vld [vmem:[%s737 + $0x28] sm:$0xf]
      %v1616 = vld [vmem:[%s737 + $0x30] sm:$0xf]
      %v1617 = vld [vmem:[%s737 + $0x38] sm:$0xf]
      %s1618 = scalar_lea.vmem %s3, 12
      %v1619 = vld [vmem:[%s1618] sm:$0xf]
      %v1628 = vunpack.c.l.b16 %v1610
      %v1629 = vunpack.c.l.b16 %v1611
      %v1630 = vunpack.c.l.b16 %v1612
      %v1631 = vunpack.c.l.b16 %v1613
      %v1632 = vunpack.c.l.b16 %v1614
      %v1633 = vunpack.c.l.b16 %v1615
      %v1634 = vunpack.c.l.b16 %v1616
      %v1635 = vunpack.c.l.b16 %v1617
      %v1636 = vpack.c.b16 %v1629, %v1628
      %v1637 = vpack.c.b16 %v1631, %v1630
      %v1638 = vpack.c.b16 %v1633, %v1632
      %v1639 = vpack.c.b16 %v1635, %v1634
      %v1641 = vsel %vm1195, %v1636, 0
      %v1644 = vsel %vm1195, %v1637, 0
      %v1647 = vsel %vm1195, %v1638, 0
      %v1650 = vsel %vm1195, %v1639, 0
      %v1653 = vsel %vm1208, %v1619, 0
      %1655 = vmatprep.subr.bf16.mxu0 0
      %1656 = vmatpush1.bf16.msra.mxu0 0
      %1657 = vmatprep.subr.bf16.mxu0 0
      %1658 = vmatpush1.bf16.msra.mxu0 0
      %1659 = vmatprep.subr.bf16.mxu0 0
      %1660 = vmatpush1.bf16.msra.mxu0 0
      %1661 = vmatprep.subr.bf16.mxu0 0
      %1662 = vmatpush1.bf16.msra.mxu0 0
      %1663 = vmatprep.subr.bf16.mxu0 0
      %1664 = vmatpush1.bf16.msra.mxu0 0
      %1665 = vmatprep.subr.bf16.mxu0 0
      %1666 = vmatpush1.bf16.msra.mxu0 0
      %1667 = vmatprep.subr.bf16.mxu0 0
      %1668 = vmatpush1.bf16.msra.mxu0 0
      %1669 = vmatprep.subr.bf16.mxu0 0
      %1670 = vmatpush1.bf16.msra.mxu0 %v1653
      %1671 = vmatprep.subr.bf16.mxu0 0
      %1672 = vmatpush2.bf16.msra.mxu0 0
      %1673 = vmatprep.subr.bf16.mxu0 0
      %1674 = vmatpush2.bf16.msra.mxu0 0
      %1675 = vmatprep.subr.bf16.mxu0 0
      %1676 = vmatpush2.bf16.msra.mxu0 0
      %1677 = vmatprep.subr.bf16.mxu0 0
      %1678 = vmatpush2.bf16.msra.mxu0 0
      %1679 = vmatprep.subr.bf16.mxu0 0
      %1680 = vmatpush2.bf16.msra.mxu0 0
      %1681 = vmatprep.subr.bf16.mxu0 0
      %1682 = vmatpush2.bf16.msra.mxu0 0
      %1683 = vmatprep.subr.bf16.mxu0 0
      %1684 = vmatpush2.bf16.msra.mxu0 0
      %1685 = vmatprep.subr.bf16.mxu0 0
      %1686 = vmatpush2.bf16.msra.mxu0 0
      %1687 = vmatprep.mubr.bf16.mxu0 0
      %1688 = vmatmul.mubr.bf16.gmra.mxu0 %v1641
      %v1689 = vpop.f32.mrf.mxu0
      %v1690 = vadd.f32 0.0, %v1689
      %v1691 = vpop.f32.mrf.mxu0
      %v1692 = vpop.f32.mrf.mxu0
      %v1693 = vadd.f32 0.0, %v1692
      %v1694 = vpop.f32.mrf.mxu0
      %1695 = vmatprep.mubr.bf16.mxu0 0
      %1696 = vmatmul.mubr.bf16.gmra.mxu0 %v1644
      %v1697 = vpop.f32.mrf.mxu0
      %v1698 = vadd.f32 0.0, %v1697
      %v1699 = vpop.f32.mrf.mxu0
      %v1700 = vpop.f32.mrf.mxu0
      %v1701 = vadd.f32 0.0, %v1700
      %v1702 = vpop.f32.mrf.mxu0
      %1703 = vmatprep.mubr.bf16.mxu0 0
      %1704 = vmatmul.mubr.bf16.gmra.mxu0 %v1647
      %v1705 = vpop.f32.mrf.mxu0
      %v1706 = vadd.f32 0.0, %v1705
      %v1707 = vpop.f32.mrf.mxu0
      %v1708 = vpop.f32.mrf.mxu0
      %v1709 = vadd.f32 0.0, %v1708
      %v1710 = vpop.f32.mrf.mxu0
      %1711 = vmatprep.mubr.bf16.mxu0 0
      %1712 = vmatmul.mubr.bf16.gmra.mxu0 %v1650
      %v1713 = vpop.f32.mrf.mxu0
      %v1714 = vadd.f32 0.0, %v1713
      %v1715 = vpop.f32.mrf.mxu0
      %v1716 = vpop.f32.mrf.mxu0
      %v1717 = vadd.f32 0.0, %v1716
      %v1718 = vpop.f32.mrf.mxu0
      %1719 = vdwg.mxu0
      %v1720 = vadd.f32 %v1602, %v1690
      %v1721 = vadd.f32 %v1603, %v1693
      %v1722 = vadd.f32 %v1604, %v1698
      %v1723 = vadd.f32 %v1605, %v1701
      %v1724 = vadd.f32 %v1606, %v1706
      %v1725 = vadd.f32 %v1607, %v1709
      %v1726 = vadd.f32 %v1608, %v1714
      %v1727 = vadd.f32 %v1609, %v1717
      %v1728 = vld [vmem:[%s671] sm:$0xf]
      %v1729 = vld [vmem:[%s671 + $0x8] sm:$0xf]
      %v1730 = vld [vmem:[%s671 + $0x10] sm:$0xf]
      %v1731 = vld [vmem:[%s671 + $0x18] sm:$0xf]
      %v1732 = vld [vmem:[%s671 + $0x20] sm:$0xf]
      %v1733 = vld [vmem:[%s671 + $0x28] sm:$0xf]
      %v1734 = vld [vmem:[%s671 + $0x30] sm:$0xf]
      %v1735 = vld [vmem:[%s671 + $0x38] sm:$0xf]
      %s1736 = scalar_lea.vmem %s3, 16
      %v1737 = vld [vmem:[%s1736] sm:$0xf]
      %v1746 = vunpack.c.l.b16 %v1728
      %v1747 = vunpack.c.l.b16 %v1729
      %v1748 = vunpack.c.l.b16 %v1730
      %v1749 = vunpack.c.l.b16 %v1731
      %v1750 = vunpack.c.l.b16 %v1732
      %v1751 = vunpack.c.l.b16 %v1733
      %v1752 = vunpack.c.l.b16 %v1734
      %v1753 = vunpack.c.l.b16 %v1735
      %v1754 = vpack.c.b16 %v1747, %v1746
      %v1755 = vpack.c.b16 %v1749, %v1748
      %v1756 = vpack.c.b16 %v1751, %v1750
      %v1757 = vpack.c.b16 %v1753, %v1752
      %v1759 = vsel %vm1195, %v1754, 0
      %v1762 = vsel %vm1195, %v1755, 0
      %v1765 = vsel %vm1195, %v1756, 0
      %v1768 = vsel %vm1195, %v1757, 0
      %v1771 = vsel %vm1208, %v1737, 0
      %1773 = vmatprep.subr.bf16.mxu0 0
      %1774 = vmatpush1.bf16.msra.mxu0 0
      %1775 = vmatprep.subr.bf16.mxu0 0
      %1776 = vmatpush1.bf16.msra.mxu0 0
      %1777 = vmatprep.subr.bf16.mxu0 0
      %1778 = vmatpush1.bf16.msra.mxu0 0
      %1779 = vmatprep.subr.bf16.mxu0 0
      %1780 = vmatpush1.bf16.msra.mxu0 0
      %1781 = vmatprep.subr.bf16.mxu0 0
      %1782 = vmatpush1.bf16.msra.mxu0 0
      %1783 = vmatprep.subr.bf16.mxu0 0
      %1784 = vmatpush1.bf16.msra.mxu0 0
      %1785 = vmatprep.subr.bf16.mxu0 0
      %1786 = vmatpush1.bf16.msra.mxu0 0
      %1787 = vmatprep.subr.bf16.mxu0 0
      %1788 = vmatpush1.bf16.msra.mxu0 %v1771
      %1789 = vmatprep.subr.bf16.mxu0 0
      %1790 = vmatpush2.bf16.msra.mxu0 0
      %1791 = vmatprep.subr.bf16.mxu0 0
      %1792 = vmatpush2.bf16.msra.mxu0 0
      %1793 = vmatprep.subr.bf16.mxu0 0
      %1794 = vmatpush2.bf16.msra.mxu0 0
      %1795 = vmatprep.subr.bf16.mxu0 0
      %1796 = vmatpush2.bf16.msra.mxu0 0
      %1797 = vmatprep.subr.bf16.mxu0 0
      %1798 = vmatpush2.bf16.msra.mxu0 0
      %1799 = vmatprep.subr.bf16.mxu0 0
      %1800 = vmatpush2.bf16.msra.mxu0 0
      %1801 = vmatprep.subr.bf16.mxu0 0
      %1802 = vmatpush2.bf16.msra.mxu0 0
      %1803 = vmatprep.subr.bf16.mxu0 0
      %1804 = vmatpush2.bf16.msra.mxu0 0
      %1805 = vmatprep.mubr.bf16.mxu0 0
      %1806 = vmatmul.mubr.bf16.gmra.mxu0 %v1759
      %v1807 = vpop.f32.mrf.mxu0
      %v1808 = vadd.f32 0.0, %v1807
      %v1809 = vpop.f32.mrf.mxu0
      %v1810 = vpop.f32.mrf.mxu0
      %v1811 = vadd.f32 0.0, %v1810
      %v1812 = vpop.f32.mrf.mxu0
      %1813 = vmatprep.mubr.bf16.mxu0 0
      %1814 = vmatmul.mubr.bf16.gmra.mxu0 %v1762
      %v1815 = vpop.f32.mrf.mxu0
      %v1816 = vadd.f32 0.0, %v1815
      %v1817 = vpop.f32.mrf.mxu0
      %v1818 = vpop.f32.mrf.mxu0
      %v1819 = vadd.f32 0.0, %v1818
      %v1820 = vpop.f32.mrf.mxu0
      %1821 = vmatprep.mubr.bf16.mxu0 0
      %1822 = vmatmul.mubr.bf16.gmra.mxu0 %v1765
      %v1823 = vpop.f32.mrf.mxu0
      %v1824 = vadd.f32 0.0, %v1823
      %v1825 = vpop.f32.mrf.mxu0
      %v1826 = vpop.f32.mrf.mxu0
      %v1827 = vadd.f32 0.0, %v1826
      %v1828 = vpop.f32.mrf.mxu0
      %1829 = vmatprep.mubr.bf16.mxu0 0
      %1830 = vmatmul.mubr.bf16.gmra.mxu0 %v1768
      %v1831 = vpop.f32.mrf.mxu0
      %v1832 = vadd.f32 0.0, %v1831
      %v1833 = vpop.f32.mrf.mxu0
      %v1834 = vpop.f32.mrf.mxu0
      %v1835 = vadd.f32 0.0, %v1834
      %v1836 = vpop.f32.mrf.mxu0
      %1837 = vdwg.mxu0
      %v1838 = vadd.f32 %v1720, %v1808
      %v1839 = vadd.f32 %v1721, %v1811
      %v1840 = vadd.f32 %v1722, %v1816
      %v1841 = vadd.f32 %v1723, %v1819
      %v1842 = vadd.f32 %v1724, %v1824
      %v1843 = vadd.f32 %v1725, %v1827
      %v1844 = vadd.f32 %v1726, %v1832
      %v1845 = vadd.f32 %v1727, %v1835
      %v1846 = vld [vmem:[%s737] sm:$0xf]
      %v1847 = vld [vmem:[%s737 + $0x4] sm:$0x1]
      %v1848 = vld [vmem:[%s737 + $0x8] sm:$0xf]
      %v1849 = vld [vmem:[%s737 + $0xc] sm:$0x1]
      %v1850 = vld [vmem:[%s737 + $0x10] sm:$0xf]
      %v1851 = vld [vmem:[%s737 + $0x14] sm:$0x1]
      %v1852 = vld [vmem:[%s737 + $0x18] sm:$0xf]
      %v1853 = vld [vmem:[%s737 + $0x1c] sm:$0x1]
      %v1854 = vld [vmem:[%s737 + $0x20] sm:$0xf]
      %v1855 = vld [vmem:[%s737 + $0x24] sm:$0x1]
      %v1856 = vld [vmem:[%s737 + $0x28] sm:$0xf]
      %v1857 = vld [vmem:[%s737 + $0x2c] sm:$0x1]
      %v1858 = vld [vmem:[%s737 + $0x30] sm:$0xf]
      %v1859 = vld [vmem:[%s737 + $0x34] sm:$0x1]
      %v1860 = vld [vmem:[%s737 + $0x38] sm:$0xf]
      %v1861 = vld [vmem:[%s737 + $0x3c] sm:$0x1]
      %v1863 = vshrl.u32 %v1846, 16
      %v1865 = vrot.slane %v1863, 4
      %v1866 = vshll.u32 %v1846, 16
      %v1868 = vrot.slane %v1866, 5
      %v1869 = vor.u32 %v1865, %v1868
      %v1870 = vrot.slane %v1869, 4
      %v1872 = vshll.u32 %v1847, 16
      %v1874 = vrot.slane %v1872, 5
      %v1875 = vsel %vm1395, %v1870, %v1874
      %v1877 = vshrl.u32 %v1848, 16
      %v1879 = vrot.slane %v1877, 4
      %v1880 = vshll.u32 %v1848, 16
      %v1882 = vrot.slane %v1880, 5
      %v1883 = vor.u32 %v1879, %v1882
      %v1884 = vrot.slane %v1883, 4
      %v1886 = vshll.u32 %v1849, 16
      %v1888 = vrot.slane %v1886, 5
      %v1889 = vsel %vm1395, %v1884, %v1888
      %v1891 = vshrl.u32 %v1850, 16
      %v1893 = vrot.slane %v1891, 4
      %v1894 = vshll.u32 %v1850, 16
      %v1896 = vrot.slane %v1894, 5
      %v1897 = vor.u32 %v1893, %v1896
      %v1898 = vrot.slane %v1897, 4
      %v1900 = vshll.u32 %v1851, 16
      %v1902 = vrot.slane %v1900, 5
      %v1903 = vsel %vm1395, %v1898, %v1902
      %v1905 = vshrl.u32 %v1852, 16
      %v1907 = vrot.slane %v1905, 4
      %v1908 = vshll.u32 %v1852, 16
      %v1910 = vrot.slane %v1908, 5
      %v1911 = vor.u32 %v1907, %v1910
      %v1912 = vrot.slane %v1911, 4
      %v1914 = vshll.u32 %v1853, 16
      %v1916 = vrot.slane %v1914, 5
      %v1917 = vsel %vm1395, %v1912, %v1916
      %v1919 = vshrl.u32 %v1854, 16
      %v1921 = vrot.slane %v1919, 4
      %v1922 = vshll.u32 %v1854, 16
      %v1924 = vrot.slane %v1922, 5
      %v1925 = vor.u32 %v1921, %v1924
      %v1926 = vrot.slane %v1925, 4
      %v1928 = vshll.u32 %v1855, 16
      %v1930 = vrot.slane %v1928, 5
      %v1931 = vsel %vm1395, %v1926, %v1930
      %v1933 = vshrl.u32 %v1856, 16
      %v1935 = vrot.slane %v1933, 4
      %v1936 = vshll.u32 %v1856, 16
      %v1938 = vrot.slane %v1936, 5
      %v1939 = vor.u32 %v1935, %v1938
      %v1940 = vrot.slane %v1939, 4
      %v1942 = vshll.u32 %v1857, 16
      %v1944 = vrot.slane %v1942, 5
      %v1945 = vsel %vm1395, %v1940, %v1944
      %v1947 = vshrl.u32 %v1858, 16
      %v1949 = vrot.slane %v1947, 4
      %v1950 = vshll.u32 %v1858, 16
      %v1952 = vrot.slane %v1950, 5
      %v1953 = vor.u32 %v1949, %v1952
      %v1954 = vrot.slane %v1953, 4
      %v1956 = vshll.u32 %v1859, 16
      %v1958 = vrot.slane %v1956, 5
      %v1959 = vsel %vm1395, %v1954, %v1958
      %v1961 = vshrl.u32 %v1860, 16
      %v1963 = vrot.slane %v1961, 4
      %v1964 = vshll.u32 %v1860, 16
      %v1966 = vrot.slane %v1964, 5
      %v1967 = vor.u32 %v1963, %v1966
      %v1968 = vrot.slane %v1967, 4
      %v1970 = vshll.u32 %v1861, 16
      %v1972 = vrot.slane %v1970, 5
      %v1973 = vsel %vm1395, %v1968, %v1972
      %s1974 = scalar_lea.vmem %s3, 20
      %v1975 = vld [vmem:[%s1974] sm:$0xf]
      %v1976 = vunpack.c.l.b16 %v1875
      %v1977 = vunpack.c.l.b16 %v1889
      %v1978 = vunpack.c.l.b16 %v1903
      %v1979 = vunpack.c.l.b16 %v1917
      %v1980 = vunpack.c.l.b16 %v1931
      %v1981 = vunpack.c.l.b16 %v1945
      %v1982 = vunpack.c.l.b16 %v1959
      %v1983 = vunpack.c.l.b16 %v1973
      %v1984 = vpack.c.b16 %v1977, %v1976
      %v1985 = vpack.c.b16 %v1979, %v1978
      %v1986 = vpack.c.b16 %v1981, %v1980
      %v1987 = vpack.c.b16 %v1983, %v1982
      %v1989 = vsel %vm1195, %v1984, 0
      %v1992 = vsel %vm1195, %v1985, 0
      %v1995 = vsel %vm1195, %v1986, 0
      %v1998 = vsel %vm1195, %v1987, 0
      %v2001 = vsel %vm1208, %v1975, 0
      %2003 = vmatprep.subr.bf16.mxu0 0
      %2004 = vmatpush1.bf16.msra.mxu0 0
      %2005 = vmatprep.subr.bf16.mxu0 0
      %2006 = vmatpush1.bf16.msra.mxu0 0
      %2007 = vmatprep.subr.bf16.mxu0 0
      %2008 = vmatpush1.bf16.msra.mxu0 0
      %2009 = vmatprep.subr.bf16.mxu0 0
      %2010 = vmatpush1.bf16.msra.mxu0 0
      %2011 = vmatprep.subr.bf16.mxu0 0
      %2012 = vmatpush1.bf16.msra.mxu0 0
      %2013 = vmatprep.subr.bf16.mxu0 0
      %2014 = vmatpush1.bf16.msra.mxu0 0
      %2015 = vmatprep.subr.bf16.mxu0 0
      %2016 = vmatpush1.bf16.msra.mxu0 0
      %2017 = vmatprep.subr.bf16.mxu0 0
      %2018 = vmatpush1.bf16.msra.mxu0 %v2001
      %2019 = vmatprep.subr.bf16.mxu0 0
      %2020 = vmatpush2.bf16.msra.mxu0 0
      %2021 = vmatprep.subr.bf16.mxu0 0
      %2022 = vmatpush2.bf16.msra.mxu0 0
      %2023 = vmatprep.subr.bf16.mxu0 0
      %2024 = vmatpush2.bf16.msra.mxu0 0
      %2025 = vmatprep.subr.bf16.mxu0 0
      %2026 = vmatpush2.bf16.msra.mxu0 0
      %2027 = vmatprep.subr.bf16.mxu0 0
      %2028 = vmatpush2.bf16.msra.mxu0 0
      %2029 = vmatprep.subr.bf16.mxu0 0
      %2030 = vmatpush2.bf16.msra.mxu0 0
      %2031 = vmatprep.subr.bf16.mxu0 0
      %2032 = vmatpush2.bf16.msra.mxu0 0
      %2033 = vmatprep.subr.bf16.mxu0 0
      %2034 = vmatpush2.bf16.msra.mxu0 0
      %2035 = vmatprep.mubr.bf16.mxu0 0
      %2036 = vmatmul.mubr.bf16.gmra.mxu0 %v1989
      %v2037 = vpop.f32.mrf.mxu0
      %v2038 = vadd.f32 0.0, %v2037
      %v2039 = vpop.f32.mrf.mxu0
      %v2040 = vpop.f32.mrf.mxu0
      %v2041 = vadd.f32 0.0, %v2040
      %v2042 = vpop.f32.mrf.mxu0
      %2043 = vmatprep.mubr.bf16.mxu0 0
      %2044 = vmatmul.mubr.bf16.gmra.mxu0 %v1992
      %v2045 = vpop.f32.mrf.mxu0
      %v2046 = vadd.f32 0.0, %v2045
      %v2047 = vpop.f32.mrf.mxu0
      %v2048 = vpop.f32.mrf.mxu0
      %v2049 = vadd.f32 0.0, %v2048
      %v2050 = vpop.f32.mrf.mxu0
      %2051 = vmatprep.mubr.bf16.mxu0 0
      %2052 = vmatmul.mubr.bf16.gmra.mxu0 %v1995
      %v2053 = vpop.f32.mrf.mxu0
      %v2054 = vadd.f32 0.0, %v2053
      %v2055 = vpop.f32.mrf.mxu0
      %v2056 = vpop.f32.mrf.mxu0
      %v2057 = vadd.f32 0.0, %v2056
      %v2058 = vpop.f32.mrf.mxu0
      %2059 = vmatprep.mubr.bf16.mxu0 0
      %2060 = vmatmul.mubr.bf16.gmra.mxu0 %v1998
      %v2061 = vpop.f32.mrf.mxu0
      %v2062 = vadd.f32 0.0, %v2061
      %v2063 = vpop.f32.mrf.mxu0
      %v2064 = vpop.f32.mrf.mxu0
      %v2065 = vadd.f32 0.0, %v2064
      %v2066 = vpop.f32.mrf.mxu0
      %2067 = vdwg.mxu0
      %v2068 = vadd.f32 %v1838, %v2038
      %v2069 = vadd.f32 %v1839, %v2041
      %v2070 = vadd.f32 %v1840, %v2046
      %v2071 = vadd.f32 %v1841, %v2049
      %v2072 = vadd.f32 %v1842, %v2054
      %v2073 = vadd.f32 %v1843, %v2057
      %v2074 = vadd.f32 %v1844, %v2062
      %v2075 = vadd.f32 %v1845, %v2065
      %v2076 = vld [vmem:[%s983] sm:$0xf]
      %v2077 = vld [vmem:[%s983 + $0x8] sm:$0xf]
      %v2078 = vld [vmem:[%s983 + $0x10] sm:$0xf]
      %v2079 = vld [vmem:[%s983 + $0x18] sm:$0xf]
      %v2080 = vld [vmem:[%s983 + $0x20] sm:$0xf]
      %v2081 = vld [vmem:[%s983 + $0x28] sm:$0xf]
      %v2082 = vld [vmem:[%s983 + $0x30] sm:$0xf]
      %v2083 = vld [vmem:[%s983 + $0x38] sm:$0xf]
      %s2084 = scalar_lea.vmem %s3, 24
      %v2085 = vld [vmem:[%s2084] sm:$0xf]
      %v2094 = vunpack.c.l.b16 %v2076
      %v2095 = vunpack.c.l.b16 %v2077
      %v2096 = vunpack.c.l.b16 %v2078
      %v2097 = vunpack.c.l.b16 %v2079
      %v2098 = vunpack.c.l.b16 %v2080
      %v2099 = vunpack.c.l.b16 %v2081
      %v2100 = vunpack.c.l.b16 %v2082
      %v2101 = vunpack.c.l.b16 %v2083
      %v2102 = vpack.c.b16 %v2095, %v2094
      %v2103 = vpack.c.b16 %v2097, %v2096
      %v2104 = vpack.c.b16 %v2099, %v2098
      %v2105 = vpack.c.b16 %v2101, %v2100
      %v2107 = vsel %vm1195, %v2102, 0
      %v2110 = vsel %vm1195, %v2103, 0
      %v2113 = vsel %vm1195, %v2104, 0
      %v2116 = vsel %vm1195, %v2105, 0
      %v2119 = vsel %vm1208, %v2085, 0
      %2121 = vmatprep.subr.bf16.mxu0 0
      %2122 = vmatpush1.bf16.msra.mxu0 0
      %2123 = vmatprep.subr.bf16.mxu0 0
      %2124 = vmatpush1.bf16.msra.mxu0 0
      %2125 = vmatprep.subr.bf16.mxu0 0
      %2126 = vmatpush1.bf16.msra.mxu0 0
      %2127 = vmatprep.subr.bf16.mxu0 0
      %2128 = vmatpush1.bf16.msra.mxu0 0
      %2129 = vmatprep.subr.bf16.mxu0 0
      %2130 = vmatpush1.bf16.msra.mxu0 0
      %2131 = vmatprep.subr.bf16.mxu0 0
      %2132 = vmatpush1.bf16.msra.mxu0 0
      %2133 = vmatprep.subr.bf16.mxu0 0
      %2134 = vmatpush1.bf16.msra.mxu0 0
      %2135 = vmatprep.subr.bf16.mxu0 0
      %2136 = vmatpush1.bf16.msra.mxu0 %v2119
      %2137 = vmatprep.subr.bf16.mxu0 0
      %2138 = vmatpush2.bf16.msra.mxu0 0
      %2139 = vmatprep.subr.bf16.mxu0 0
      %2140 = vmatpush2.bf16.msra.mxu0 0
      %2141 = vmatprep.subr.bf16.mxu0 0
      %2142 = vmatpush2.bf16.msra.mxu0 0
      %2143 = vmatprep.subr.bf16.mxu0 0
      %2144 = vmatpush2.bf16.msra.mxu0 0
      %2145 = vmatprep.subr.bf16.mxu0 0
      %2146 = vmatpush2.bf16.msra.mxu0 0
      %2147 = vmatprep.subr.bf16.mxu0 0
      %2148 = vmatpush2.bf16.msra.mxu0 0
      %2149 = vmatprep.subr.bf16.mxu0 0
      %2150 = vmatpush2.bf16.msra.mxu0 0
      %2151 = vmatprep.subr.bf16.mxu0 0
      %2152 = vmatpush2.bf16.msra.mxu0 0
      %2153 = vmatprep.mubr.bf16.mxu0 0
      %2154 = vmatmul.mubr.bf16.gmra.mxu0 %v2107
      %v2155 = vpop.f32.mrf.mxu0
      %v2156 = vadd.f32 0.0, %v2155
      %v2157 = vpop.f32.mrf.mxu0
      %v2158 = vpop.f32.mrf.mxu0
      %v2159 = vadd.f32 0.0, %v2158
      %v2160 = vpop.f32.mrf.mxu0
      %2161 = vmatprep.mubr.bf16.mxu0 0
      %2162 = vmatmul.mubr.bf16.gmra.mxu0 %v2110
      %v2163 = vpop.f32.mrf.mxu0
      %v2164 = vadd.f32 0.0, %v2163
      %v2165 = vpop.f32.mrf.mxu0
      %v2166 = vpop.f32.mrf.mxu0
      %v2167 = vadd.f32 0.0, %v2166
      %v2168 = vpop.f32.mrf.mxu0
      %2169 = vmatprep.mubr.bf16.mxu0 0
      %2170 = vmatmul.mubr.bf16.gmra.mxu0 %v2113
      %v2171 = vpop.f32.mrf.mxu0
      %v2172 = vadd.f32 0.0, %v2171
      %v2173 = vpop.f32.mrf.mxu0
      %v2174 = vpop.f32.mrf.mxu0
      %v2175 = vadd.f32 0.0, %v2174
      %v2176 = vpop.f32.mrf.mxu0
      %2177 = vmatprep.mubr.bf16.mxu0 0
      %2178 = vmatmul.mubr.bf16.gmra.mxu0 %v2116
      %v2179 = vpop.f32.mrf.mxu0
      %v2180 = vadd.f32 0.0, %v2179
      %v2181 = vpop.f32.mrf.mxu0
      %v2182 = vpop.f32.mrf.mxu0
      %v2183 = vadd.f32 0.0, %v2182
      %v2184 = vpop.f32.mrf.mxu0
      %2185 = vdwg.mxu0
      %v2186 = vadd.f32 %v2068, %v2156
      %v2187 = vadd.f32 %v2069, %v2159
      %v2188 = vadd.f32 %v2070, %v2164
      %v2189 = vadd.f32 %v2071, %v2167
      %v2190 = vadd.f32 %v2072, %v2172
      %v2191 = vadd.f32 %v2073, %v2175
      %v2192 = vadd.f32 %v2074, %v2180
      %v2193 = vadd.f32 %v2075, %v2183
      %v2194 = vld [vmem:[%s918] sm:$0xf]
      %v2195 = vld [vmem:[%s918 + $0x8] sm:$0xf]
      %v2196 = vld [vmem:[%s918 + $0x10] sm:$0xf]
      %v2197 = vld [vmem:[%s918 + $0x18] sm:$0xf]
      %v2198 = vld [vmem:[%s918 + $0x20] sm:$0xf]
      %v2199 = vld [vmem:[%s918 + $0x28] sm:$0xf]
      %v2200 = vld [vmem:[%s918 + $0x30] sm:$0xf]
      %v2201 = vld [vmem:[%s918 + $0x38] sm:$0xf]
      %s2202 = scalar_lea.vmem %s3, 28
      %v2203 = vld [vmem:[%s2202] sm:$0xf]
      %v2212 = vunpack.c.l.b16 %v2194
      %v2213 = vunpack.c.l.b16 %v2195
      %v2214 = vunpack.c.l.b16 %v2196
      %v2215 = vunpack.c.l.b16 %v2197
      %v2216 = vunpack.c.l.b16 %v2198
      %v2217 = vunpack.c.l.b16 %v2199
      %v2218 = vunpack.c.l.b16 %v2200
      %v2219 = vunpack.c.l.b16 %v2201
      %v2220 = vpack.c.b16 %v2213, %v2212
      %v2221 = vpack.c.b16 %v2215, %v2214
      %v2222 = vpack.c.b16 %v2217, %v2216
      %v2223 = vpack.c.b16 %v2219, %v2218
      %v2225 = vsel %vm1195, %v2220, 0
      %v2228 = vsel %vm1195, %v2221, 0
      %v2231 = vsel %vm1195, %v2222, 0
      %v2234 = vsel %vm1195, %v2223, 0
      %v2237 = vsel %vm1208, %v2203, 0
      %2239 = vmatprep.subr.bf16.mxu0 0
      %2240 = vmatpush1.bf16.msra.mxu0 0
      %2241 = vmatprep.subr.bf16.mxu0 0
      %2242 = vmatpush1.bf16.msra.mxu0 0
      %2243 = vmatprep.subr.bf16.mxu0 0
      %2244 = vmatpush1.bf16.msra.mxu0 0
      %2245 = vmatprep.subr.bf16.mxu0 0
      %2246 = vmatpush1.bf16.msra.mxu0 0
      %2247 = vmatprep.subr.bf16.mxu0 0
      %2248 = vmatpush1.bf16.msra.mxu0 0
      %2249 = vmatprep.subr.bf16.mxu0 0
      %2250 = vmatpush1.bf16.msra.mxu0 0
      %2251 = vmatprep.subr.bf16.mxu0 0
      %2252 = vmatpush1.bf16.msra.mxu0 0
      %2253 = vmatprep.subr.bf16.mxu0 0
      %2254 = vmatpush1.bf16.msra.mxu0 %v2237
      %2255 = vmatprep.subr.bf16.mxu0 0
      %2256 = vmatpush2.bf16.msra.mxu0 0
      %2257 = vmatprep.subr.bf16.mxu0 0
      %2258 = vmatpush2.bf16.msra.mxu0 0
      %2259 = vmatprep.subr.bf16.mxu0 0
      %2260 = vmatpush2.bf16.msra.mxu0 0
      %2261 = vmatprep.subr.bf16.mxu0 0
      %2262 = vmatpush2.bf16.msra.mxu0 0
      %2263 = vmatprep.subr.bf16.mxu0 0
      %2264 = vmatpush2.bf16.msra.mxu0 0
      %2265 = vmatprep.subr.bf16.mxu0 0
      %2266 = vmatpush2.bf16.msra.mxu0 0
      %2267 = vmatprep.subr.bf16.mxu0 0
      %2268 = vmatpush2.bf16.msra.mxu0 0
      %2269 = vmatprep.subr.bf16.mxu0 0
      %2270 = vmatpush2.bf16.msra.mxu0 0
      %2271 = vmatprep.mubr.bf16.mxu0 0
      %2272 = vmatmul.mubr.bf16.gmra.mxu0 %v2225
      %v2273 = vpop.f32.mrf.mxu0
      %v2274 = vadd.f32 0.0, %v2273
      %v2275 = vpop.f32.mrf.mxu0
      %v2276 = vpop.f32.mrf.mxu0
      %v2277 = vadd.f32 0.0, %v2276
      %v2278 = vpop.f32.mrf.mxu0
      %2279 = vmatprep.mubr.bf16.mxu0 0
      %2280 = vmatmul.mubr.bf16.gmra.mxu0 %v2228
      %v2281 = vpop.f32.mrf.mxu0
      %v2282 = vadd.f32 0.0, %v2281
      %v2283 = vpop.f32.mrf.mxu0
      %v2284 = vpop.f32.mrf.mxu0
      %v2285 = vadd.f32 0.0, %v2284
      %v2286 = vpop.f32.mrf.mxu0
      %2287 = vmatprep.mubr.bf16.mxu0 0
      %2288 = vmatmul.mubr.bf16.gmra.mxu0 %v2231
      %v2289 = vpop.f32.mrf.mxu0
      %v2290 = vadd.f32 0.0, %v2289
      %v2291 = vpop.f32.mrf.mxu0
      %v2292 = vpop.f32.mrf.mxu0
      %v2293 = vadd.f32 0.0, %v2292
      %v2294 = vpop.f32.mrf.mxu0
      %2295 = vmatprep.mubr.bf16.mxu0 0
      %2296 = vmatmul.mubr.bf16.gmra.mxu0 %v2234
      %v2297 = vpop.f32.mrf.mxu0
      %v2298 = vadd.f32 0.0, %v2297
      %v2299 = vpop.f32.mrf.mxu0
      %v2300 = vpop.f32.mrf.mxu0
      %v2301 = vadd.f32 0.0, %v2300
      %v2302 = vpop.f32.mrf.mxu0
      %2303 = vdwg.mxu0
      %v2304 = vadd.f32 %v2186, %v2274
      %v2305 = vadd.f32 %v2187, %v2277
      %v2306 = vadd.f32 %v2188, %v2282
      %v2307 = vadd.f32 %v2189, %v2285
      %v2308 = vadd.f32 %v2190, %v2290
      %v2309 = vadd.f32 %v2191, %v2293
      %v2310 = vadd.f32 %v2192, %v2298
      %v2311 = vadd.f32 %v2193, %v2301
      %v2312 = vld [vmem:[%s983] sm:$0xf]
      %v2313 = vld [vmem:[%s983 + $0x4] sm:$0x1]
      %v2314 = vld [vmem:[%s983 + $0x8] sm:$0xf]
      %v2315 = vld [vmem:[%s983 + $0xc] sm:$0x1]
      %v2316 = vld [vmem:[%s983 + $0x10] sm:$0xf]
      %v2317 = vld [vmem:[%s983 + $0x14] sm:$0x1]
      %v2318 = vld [vmem:[%s983 + $0x18] sm:$0xf]
      %v2319 = vld [vmem:[%s983 + $0x1c] sm:$0x1]
      %v2320 = vld [vmem:[%s983 + $0x20] sm:$0xf]
      %v2321 = vld [vmem:[%s983 + $0x24] sm:$0x1]
      %v2322 = vld [vmem:[%s983 + $0x28] sm:$0xf]
      %v2323 = vld [vmem:[%s983 + $0x2c] sm:$0x1]
      %v2324 = vld [vmem:[%s983 + $0x30] sm:$0xf]
      %v2325 = vld [vmem:[%s983 + $0x34] sm:$0x1]
      %v2326 = vld [vmem:[%s983 + $0x38] sm:$0xf]
      %v2327 = vld [vmem:[%s983 + $0x3c] sm:$0x1]
      %v2329 = vshrl.u32 %v2312, 16
      %v2331 = vrot.slane %v2329, 4
      %v2332 = vshll.u32 %v2312, 16
      %v2334 = vrot.slane %v2332, 5
      %v2335 = vor.u32 %v2331, %v2334
      %v2336 = vrot.slane %v2335, 4
      %v2338 = vshll.u32 %v2313, 16
      %v2340 = vrot.slane %v2338, 5
      %v2341 = vsel %vm1395, %v2336, %v2340
      %v2343 = vshrl.u32 %v2314, 16
      %v2345 = vrot.slane %v2343, 4
      %v2346 = vshll.u32 %v2314, 16
      %v2348 = vrot.slane %v2346, 5
      %v2349 = vor.u32 %v2345, %v2348
      %v2350 = vrot.slane %v2349, 4
      %v2352 = vshll.u32 %v2315, 16
      %v2354 = vrot.slane %v2352, 5
      %v2355 = vsel %vm1395, %v2350, %v2354
      %v2357 = vshrl.u32 %v2316, 16
      %v2359 = vrot.slane %v2357, 4
      %v2360 = vshll.u32 %v2316, 16
      %v2362 = vrot.slane %v2360, 5
      %v2363 = vor.u32 %v2359, %v2362
      %v2364 = vrot.slane %v2363, 4
      %v2366 = vshll.u32 %v2317, 16
      %v2368 = vrot.slane %v2366, 5
      %v2369 = vsel %vm1395, %v2364, %v2368
      %v2371 = vshrl.u32 %v2318, 16
      %v2373 = vrot.slane %v2371, 4
      %v2374 = vshll.u32 %v2318, 16
      %v2376 = vrot.slane %v2374, 5
      %v2377 = vor.u32 %v2373, %v2376
      %v2378 = vrot.slane %v2377, 4
      %v2380 = vshll.u32 %v2319, 16
      %v2382 = vrot.slane %v2380, 5
      %v2383 = vsel %vm1395, %v2378, %v2382
      %v2385 = vshrl.u32 %v2320, 16
      %v2387 = vrot.slane %v2385, 4
      %v2388 = vshll.u32 %v2320, 16
      %v2390 = vrot.slane %v2388, 5
      %v2391 = vor.u32 %v2387, %v2390
      %v2392 = vrot.slane %v2391, 4
      %v2394 = vshll.u32 %v2321, 16
      %v2396 = vrot.slane %v2394, 5
      %v2397 = vsel %vm1395, %v2392, %v2396
      %v2399 = vshrl.u32 %v2322, 16
      %v2401 = vrot.slane %v2399, 4
      %v2402 = vshll.u32 %v2322, 16
      %v2404 = vrot.slane %v2402, 5
      %v2405 = vor.u32 %v2401, %v2404
      %v2406 = vrot.slane %v2405, 4
      %v2408 = vshll.u32 %v2323, 16
      %v2410 = vrot.slane %v2408, 5
      %v2411 = vsel %vm1395, %v2406, %v2410
      %v2413 = vshrl.u32 %v2324, 16
      %v2415 = vrot.slane %v2413, 4
      %v2416 = vshll.u32 %v2324, 16
      %v2418 = vrot.slane %v2416, 5
      %v2419 = vor.u32 %v2415, %v2418
      %v2420 = vrot.slane %v2419, 4
      %v2422 = vshll.u32 %v2325, 16
      %v2424 = vrot.slane %v2422, 5
      %v2425 = vsel %vm1395, %v2420, %v2424
      %v2427 = vshrl.u32 %v2326, 16
      %v2429 = vrot.slane %v2427, 4
      %v2430 = vshll.u32 %v2326, 16
      %v2432 = vrot.slane %v2430, 5
      %v2433 = vor.u32 %v2429, %v2432
      %v2434 = vrot.slane %v2433, 4
      %v2436 = vshll.u32 %v2327, 16
      %v2438 = vrot.slane %v2436, 5
      %v2439 = vsel %vm1395, %v2434, %v2438
      %s2440 = scalar_lea.vmem %s3, 32
      %v2441 = vld [vmem:[%s2440] sm:$0xf]
      %v2442 = vunpack.c.l.b16 %v2341
      %v2443 = vunpack.c.l.b16 %v2355
      %v2444 = vunpack.c.l.b16 %v2369
      %v2445 = vunpack.c.l.b16 %v2383
      %v2446 = vunpack.c.l.b16 %v2397
      %v2447 = vunpack.c.l.b16 %v2411
      %v2448 = vunpack.c.l.b16 %v2425
      %v2449 = vunpack.c.l.b16 %v2439
      %v2450 = vpack.c.b16 %v2443, %v2442
      %v2451 = vpack.c.b16 %v2445, %v2444
      %v2452 = vpack.c.b16 %v2447, %v2446
      %v2453 = vpack.c.b16 %v2449, %v2448
      %v2455 = vsel %vm1195, %v2450, 0
      %v2458 = vsel %vm1195, %v2451, 0
      %v2461 = vsel %vm1195, %v2452, 0
      %v2464 = vsel %vm1195, %v2453, 0
      %v2467 = vsel %vm1208, %v2441, 0
      %2469 = vmatprep.subr.bf16.mxu0 0
      %2470 = vmatpush1.bf16.msra.mxu0 0
      %2471 = vmatprep.subr.bf16.mxu0 0
      %2472 = vmatpush1.bf16.msra.mxu0 0
      %2473 = vmatprep.subr.bf16.mxu0 0
      %2474 = vmatpush1.bf16.msra.mxu0 0
      %2475 = vmatprep.subr.bf16.mxu0 0
      %2476 = vmatpush1.bf16.msra.mxu0 0
      %2477 = vmatprep.subr.bf16.mxu0 0
      %2478 = vmatpush1.bf16.msra.mxu0 0
      %2479 = vmatprep.subr.bf16.mxu0 0
      %2480 = vmatpush1.bf16.msra.mxu0 0
      %2481 = vmatprep.subr.bf16.mxu0 0
      %2482 = vmatpush1.bf16.msra.mxu0 0
      %2483 = vmatprep.subr.bf16.mxu0 0
      %2484 = vmatpush1.bf16.msra.mxu0 %v2467
      %2485 = vmatprep.subr.bf16.mxu0 0
      %2486 = vmatpush2.bf16.msra.mxu0 0
      %2487 = vmatprep.subr.bf16.mxu0 0
      %2488 = vmatpush2.bf16.msra.mxu0 0
      %2489 = vmatprep.subr.bf16.mxu0 0
      %2490 = vmatpush2.bf16.msra.mxu0 0
      %2491 = vmatprep.subr.bf16.mxu0 0
      %2492 = vmatpush2.bf16.msra.mxu0 0
      %2493 = vmatprep.subr.bf16.mxu0 0
      %2494 = vmatpush2.bf16.msra.mxu0 0
      %2495 = vmatprep.subr.bf16.mxu0 0
      %2496 = vmatpush2.bf16.msra.mxu0 0
      %2497 = vmatprep.subr.bf16.mxu0 0
      %2498 = vmatpush2.bf16.msra.mxu0 0
      %2499 = vmatprep.subr.bf16.mxu0 0
      %2500 = vmatpush2.bf16.msra.mxu0 0
      %2501 = vmatprep.mubr.bf16.mxu0 0
      %2502 = vmatmul.mubr.bf16.gmra.mxu0 %v2455
      %v2503 = vpop.f32.mrf.mxu0
      %v2504 = vadd.f32 0.0, %v2503
      %v2505 = vpop.f32.mrf.mxu0
      %v2506 = vpop.f32.mrf.mxu0
      %v2507 = vadd.f32 0.0, %v2506
      %v2508 = vpop.f32.mrf.mxu0
      %2509 = vmatprep.mubr.bf16.mxu0 0
      %2510 = vmatmul.mubr.bf16.gmra.mxu0 %v2458
      %v2511 = vpop.f32.mrf.mxu0
      %v2512 = vadd.f32 0.0, %v2511
      %v2513 = vpop.f32.mrf.mxu0
      %v2514 = vpop.f32.mrf.mxu0
      %v2515 = vadd.f32 0.0, %v2514
      %v2516 = vpop.f32.mrf.mxu0
      %2517 = vmatprep.mubr.bf16.mxu0 0
      %2518 = vmatmul.mubr.bf16.gmra.mxu0 %v2461
      %v2519 = vpop.f32.mrf.mxu0
      %v2520 = vadd.f32 0.0, %v2519
      %v2521 = vpop.f32.mrf.mxu0
      %v2522 = vpop.f32.mrf.mxu0
      %v2523 = vadd.f32 0.0, %v2522
      %v2524 = vpop.f32.mrf.mxu0
      %2525 = vmatprep.mubr.bf16.mxu0 0
      %2526 = vmatmul.mubr.bf16.gmra.mxu0 %v2464
      %v2527 = vpop.f32.mrf.mxu0
      %v2528 = vadd.f32 0.0, %v2527
      %v2529 = vpop.f32.mrf.mxu0
      %v2530 = vpop.f32.mrf.mxu0
      %v2531 = vadd.f32 0.0, %v2530
      %v2532 = vpop.f32.mrf.mxu0
      %2533 = vdwg.mxu0
      %v2534 = vadd.f32 %v2304, %v2504
      %v2535 = vadd.f32 %v2305, %v2507
      %v2536 = vadd.f32 %v2306, %v2512
      %v2537 = vadd.f32 %v2307, %v2515
      %v2538 = vadd.f32 %v2308, %v2520
      %v2539 = vadd.f32 %v2309, %v2523
      %v2540 = vadd.f32 %v2310, %v2528
      %v2541 = vadd.f32 %v2311, %v2531
      %v2542 = vld [vmem:[%s4] sm:$0x1]
      %v2544 = vlaneseq
      %v2545 = vshrl.u32 %v2544, 7
      %v2546 = vsub.s32 0, %v2545
      %v2547 = vrot.slane %v2542, %v2546
      %v2549 = vadd.f32 %v2534, %v2547
      %v2550 = vadd.f32 %v2535, %v2547
      %v2551 = vadd.f32 %v2536, %v2547
      %v2552 = vadd.f32 %v2537, %v2547
      %v2553 = vadd.f32 %v2538, %v2547
      %v2554 = vadd.f32 %v2539, %v2547
      %v2555 = vadd.f32 %v2540, %v2547
      %v2556 = vadd.f32 %v2541, %v2547
      %v2557 = vmax.f32 %v2549, 0.0
      %v2558 = vmax.f32 %v2550, 0.0
      %v2559 = vmax.f32 %v2551, 0.0
      %v2560 = vmax.f32 %v2552, 0.0
      %v2561 = vmax.f32 %v2553, 0.0
      %v2562 = vmax.f32 %v2554, 0.0
      %v2563 = vmax.f32 %v2555, 0.0
      %v2564 = vmax.f32 %v2556, 0.0
      %v2565 = vpack.c.bf16 %v2558, %v2557
      %v2566 = vpack.c.bf16 %v2560, %v2559
      %v2567 = vpack.c.bf16 %v2562, %v2561
      %v2568 = vpack.c.bf16 %v2564, %v2563
      %v2569 = vld [vmem:[%s273] sm:$0xf]
      %v2570 = vld [vmem:[%s273 + $0x4] sm:$0xf]
      %v2571 = vld [vmem:[%s273 + $0x8] sm:$0xf]
      %v2572 = vld [vmem:[%s273 + $0xc] sm:$0xf]
      %v2573 = vld [vmem:[%s273 + $0x10] sm:$0xf]
      %v2574 = vld [vmem:[%s273 + $0x14] sm:$0xf]
      %v2575 = vld [vmem:[%s273 + $0x18] sm:$0xf]
      %v2576 = vld [vmem:[%s273 + $0x1c] sm:$0xf]
      %v2585 = vunpack.c.l.b16 %v2569
      %v2586 = vunpack.c.l.b16 %v2570
      %v2587 = vunpack.c.l.b16 %v2571
      %v2588 = vunpack.c.l.b16 %v2572
      %v2589 = vunpack.c.l.b16 %v2573
      %v2590 = vunpack.c.l.b16 %v2574
      %v2591 = vunpack.c.l.b16 %v2575
      %v2592 = vunpack.c.l.b16 %v2576
      %v2593 = vpack.c.b16 %v2586, %v2585
      %v2594 = vpack.c.b16 %v2588, %v2587
      %v2595 = vpack.c.b16 %v2590, %v2589
      %v2596 = vpack.c.b16 %v2592, %v2591
      %2597 = vrot.lane.b32.xlu0 %v2593, 8
      %v2598 = vpop.permute.xlu0 %2597
      %2599 = vrot.lane.b32.xlu0 %v2594, 8
      %v2600 = vpop.permute.xlu0 %2599
      %2601 = vrot.lane.b32.xlu0 %v2595, 8
      %v2602 = vpop.permute.xlu0 %2601
      %2603 = vrot.lane.b32.xlu0 %v2596, 8
      %v2604 = vpop.permute.xlu0 %2603
      %v2607 = vsel %vm1195, %v2565, %v2598
      %v2610 = vsel %vm1195, %v2566, %v2600
      %v2613 = vsel %vm1195, %v2567, %v2602
      %v2616 = vsel %vm1195, %v2568, %v2604
      %v2617 = vld [vmem:[%s5] sm:$0xf]
      %v2618 = vld [vmem:[%s5 + $0x4] sm:$0x3]
      %v2619 = vld [vmem:[%s6] sm:$0x1]
      %v2621 = vlaneseq
      %v2622 = vshrl.u32 %v2621, 7
      %v2623 = vsub.s32 0, %v2622
      %v2624 = vrot.slane %v2619, %v2623
      %v2628 = vunpack.c.l.b16 %v2617
      %v2629 = vunpack.c.l.b16 %v2618
      %v2630 = vpack.c.b16 %v2629, %v2628
      %vm2631 = vcmask 97280
      %v2632 = vsel %vm2631, %v2607, 0
      %v2634 = vsel %vm2631, %v2610, 0
      %v2636 = vsel %vm2631, %v2613, 0
      %v2638 = vsel %vm2631, %v2616, 0
      %vm2640 = vcmask 1045504
      %v2642 = vsel %vm2640, %v2630, 0
      %2644 = vmatprep.subr.bf16.mxu0 0
      %2645 = vmatpush1.bf16.msra.mxu0 0
      %2646 = vmatprep.subr.bf16.mxu0 0
      %2647 = vmatpush1.bf16.msra.mxu0 0
      %2648 = vmatprep.subr.bf16.mxu0 0
      %2649 = vmatpush1.bf16.msra.mxu0 0
      %2650 = vmatprep.subr.bf16.mxu0 0
      %2651 = vmatpush1.bf16.msra.mxu0 0
      %2652 = vmatprep.subr.bf16.mxu0 0
      %2653 = vmatpush1.bf16.msra.mxu0 0
      %2654 = vmatprep.subr.bf16.mxu0 0
      %2655 = vmatpush1.bf16.msra.mxu0 0
      %2656 = vmatprep.subr.bf16.mxu0 0
      %2657 = vmatpush1.bf16.msra.mxu0 0
      %2658 = vmatprep.subr.bf16.mxu0 0
      %2659 = vmatpush1.bf16.msra.mxu0 %v2642
      %2660 = vmatprep.subr.bf16.mxu0 0
      %2661 = vmatpush2.bf16.msra.mxu0 0
      %2662 = vmatprep.subr.bf16.mxu0 0
      %2663 = vmatpush2.bf16.msra.mxu0 0
      %2664 = vmatprep.subr.bf16.mxu0 0
      %2665 = vmatpush2.bf16.msra.mxu0 0
      %2666 = vmatprep.subr.bf16.mxu0 0
      %2667 = vmatpush2.bf16.msra.mxu0 0
      %2668 = vmatprep.subr.bf16.mxu0 0
      %2669 = vmatpush2.bf16.msra.mxu0 0
      %2670 = vmatprep.subr.bf16.mxu0 0
      %2671 = vmatpush2.bf16.msra.mxu0 0
      %2672 = vmatprep.subr.bf16.mxu0 0
      %2673 = vmatpush2.bf16.msra.mxu0 0
      %2674 = vmatprep.subr.bf16.mxu0 0
      %2675 = vmatpush2.bf16.msra.mxu0 0
      %2676 = vmatprep.mubr.bf16.mxu0 0
      %2677 = vmatmul.mubr.bf16.gmra.mxu0 %v2632
      %v2678 = vpop.f32.mrf.mxu0
      %v2679 = vadd.f32 %v2624, %v2678
      %v2680 = vpop.f32.mrf.mxu0
      %v2681 = vpop.f32.mrf.mxu0
      %v2682 = vadd.f32 %v2624, %v2681
      %v2683 = vpop.f32.mrf.mxu0
      %2684 = vmatprep.mubr.bf16.mxu0 0
      %2685 = vmatmul.mubr.bf16.gmra.mxu0 %v2634
      %v2686 = vpop.f32.mrf.mxu0
      %v2687 = vadd.f32 %v2624, %v2686
      %v2688 = vpop.f32.mrf.mxu0
      %v2689 = vpop.f32.mrf.mxu0
      %v2690 = vadd.f32 %v2624, %v2689
      %v2691 = vpop.f32.mrf.mxu0
      %2692 = vmatprep.mubr.bf16.mxu0 0
      %2693 = vmatmul.mubr.bf16.gmra.mxu0 %v2636
      %v2694 = vpop.f32.mrf.mxu0
      %v2695 = vadd.f32 %v2624, %v2694
      %v2696 = vpop.f32.mrf.mxu0
      %v2697 = vpop.f32.mrf.mxu0
      %v2698 = vadd.f32 %v2624, %v2697
      %v2699 = vpop.f32.mrf.mxu0
      %2700 = vmatprep.mubr.bf16.mxu0 0
      %2701 = vmatmul.mubr.bf16.gmra.mxu0 %v2638
      %v2702 = vpop.f32.mrf.mxu0
      %v2703 = vadd.f32 %v2624, %v2702
      %v2704 = vpop.f32.mrf.mxu0
      %v2705 = vpop.f32.mrf.mxu0
      %v2706 = vadd.f32 %v2624, %v2705
      %v2707 = vpop.f32.mrf.mxu0
      %2708 = vdwg.mxu0
      %v2709 = vmax.f32 %v2679, 0.0
      %v2710 = vmax.f32 %v2682, 0.0
      %v2711 = vmax.f32 %v2687, 0.0
      %v2712 = vmax.f32 %v2690, 0.0
      %v2713 = vmax.f32 %v2695, 0.0
      %v2714 = vmax.f32 %v2698, 0.0
      %v2715 = vmax.f32 %v2703, 0.0
      %v2716 = vmax.f32 %v2706, 0.0
      %2717 = vst.msk [vmem:[%s278] sm:$0xff] %vm1195, %v2709
      %2718 = vst.msk [vmem:[%s278 + $0x8] sm:$0xff] %vm1195, %v2710
      %2719 = vst.msk [vmem:[%s278 + $0x10] sm:$0xff] %vm1195, %v2711
      %2720 = vst.msk [vmem:[%s278 + $0x18] sm:$0xff] %vm1195, %v2712
      %2721 = vst.msk [vmem:[%s278 + $0x20] sm:$0xff] %vm1195, %v2713
      %2722 = vst.msk [vmem:[%s278 + $0x28] sm:$0xff] %vm1195, %v2714
      %2723 = vst.msk [vmem:[%s278 + $0x30] sm:$0xff] %vm1195, %v2715
      %2724 = vst.msk [vmem:[%s278 + $0x38] sm:$0xff] %vm1195, %v2716
      %p2725 = scmp.lt.s32.totalorder %s18, 1
      %s2726 = scalar_select %p2725, %s18, 1
      %s2727 = smul.addr %s2726, 8
      %s2728 = smul.addr %s2727, 8
      %s2729 = scalar_lea.vmem %s7, %s2728
      // Predicated region
      $region49: #{tpu_custom_call.1} parent=47 // pred_check
        %p2730 = pneg %p188
      $region50: #{tpu_custom_call.1} parent=47 // pred_check_branch
        %2732 = sbr.rel (%p2730) target = $region52
      $region51: #{tpu_custom_call.1} parent=47 // pred_region
        _
      $region52: #{tpu_custom_call.1} parent=47 // pred_fallthru
        _
    $region48: #{tpu_custom_call.1} parent=5 // pred_fallthru
      _
    %p2733 = scmp.le.s32.totalorder 2, %s13
    // Predicated region
    $region53: #{tpu_custom_call.1} parent=5 // pred_check
      %p2734 = pneg %p2733
    $region54: #{tpu_custom_call.1} parent=5 // pred_check_branch
      %2736 = sbr.rel (%p2734) target = $region56
    $region55: #{tpu_custom_call.1} parent=5 // pred_region
      %s2737 = ssub.s32 %s13, 2
      // Predicated region
      $region57: #{tpu_custom_call.1} parent=55 // pred_check
        %p2738 = pneg %p194
      $region58: #{tpu_custom_call.1} parent=55 // pred_check_branch
        %2740 = sbr.rel (%p2738) target = $region60
      $region59: #{tpu_custom_call.1} parent=55 // pred_region
        %p2741 = scmp.lt.s32.totalorder %s19, 1
        %s2742 = scalar_select %p2741, %s19, 1
        %s2743 = smul.addr %s2742, 8
        %s2744 = smul.addr %s2743, 8
        %s2745 = scalar_lea.vmem %s7, %s2744
      $region60: #{tpu_custom_call.1} parent=55 // pred_fallthru
        _
    $region56: #{tpu_custom_call.1} parent=5 // pred_fallthru
      _
  $region6: #{tpu_custom_call.1} parent=0 // loop_footer
    %s17 = sadd.s32 1, %s13
  $region7: #{tpu_custom_call.1} parent=0 // loop_footer_branch
    %12 = sbr.rel target = $region3
  $region8: #{tpu_custom_call.1} parent=0 // loop_exit
    _

</llo_original>
